<compile_context>
chip_gen: v6e
topology: v6e:2x2x1
jax: 0.10.0
libtpu: 0.0.40
codegen_flags: <defaults>
</compile_context>

<pallas_src>
import jax
import jax.numpy as jnp
from jax.experimental import pallas as pl
from jax.experimental.pallas import tpu as pltpu
import numpy as np

# ---------------- model dimensions (small, consistent with the module) -------
V = 50        # vocab size
E = 32        # embedding dim
H = 32        # LSTM hidden dim
DE = 16       # external-feature dim (exts)
EH = 32       # ext_linears output dim
MID = 32      # first `linears` layer output dim
C = 11        # number of moral-foundation classes (final output dim)
B = 2         # batch
T = 8         # sequence length
LANES = 128   # lane width of the packed weight/bias slabs (= 4*H here)

# Row offsets inside the packed bf16 weight slab (all multiples of 32, so all
# slices are bf16 sublane-tile aligned).
OFF_WIH = 0                # (E,  4H)  input->gates, g cols x2
OFF_WHH = OFF_WIH + E      # (H,  4H)  hidden->gates, g cols x2
OFF_WE = OFF_WHH + H       # (E,  128) ext_linears[0].T, rows DE: and lanes EH: zero
OFF_W1H = OFF_WE + E       # (H,  128) linears[0].T hidden half, lanes MID: zero
OFF_W1E = OFF_W1H + H      # (EH, 128) linears[0].T ext half,    lanes MID: zero
OFF_W2 = OFF_W1E + EH      # (MID,128) linears[1].T,             lanes C:   zero
W_ROWS = OFF_W2 + MID      # 192


# --------------------------- fused forward kernel -----------------------------
def fused_kernel(mask_ref, acts_ref, w_ref, b_ref, out_ref):
    f32 = jnp.float32
    bf16 = jnp.bfloat16

    # ---- weights: single bf16 slab, pre-transposed, g-gate columns x2 -------
    w_ih = w_ref[OFF_WIH:OFF_WIH + E, :]          # (E, 4H)
    # Loop-invariant value read once -> the MXU RHS push is hoisted out of the
    # unrolled recurrence and W_hh stays resident across all T steps.
    w_hh = w_ref[OFF_WHH:OFF_WHH + H, :]          # (H, 4H)

    # ---- hoisted input projection over all timesteps (time-major rows) ------
    x_flat = acts_ref[0:T * B, :]                 # (T*B, E) bf16
    xp = jnp.dot(x_flat, w_ih, preferred_element_type=f32) + b_ref[0:1, :]
    xp = xp.reshape(T, B, 4 * H)                  # per-step pick is leading-dim

    # ---- packed-sequence validity: one compare, fully off the h/c chain -----
    valid_all = mask_ref[...] > 0.5               # (T, B, H) bool

    h = jnp.zeros((B, H), f32)
    c = jnp.zeros((B, H), f32)

    # ---- LSTM recurrence: static unroll, one full-vreg EUP pass per step ----
    for t in range(T):
        gates = xp[t] + jnp.dot(h.astype(bf16), w_hh,
                                preferred_element_type=f32)     # (B, 4H) f32
        sig = jax.nn.sigmoid(gates)               # single EUP pass over 4H lanes
        i_g = sig[:, 0 * H:1 * H]
        f_g = sig[:, 1 * H:2 * H]
        g_g = 2.0 * sig[:, 2 * H:3 * H] - 1.0     # tanh(x) = 2*sigmoid(2x) - 1
        o_g = sig[:, 3 * H:4 * H]

        c_new = f_g * c + i_g * g_g
        h_new = o_g * jnp.tanh(c_new)

        valid = valid_all[t]                      # (B, H) bool
        c = jnp.where(valid, c_new, c)
        h = jnp.where(valid, h_new, h)

    # ---- fused head: ext_linears + relu, split linears[0], linears[1] -------
    ext = acts_ref[T * B:T * B + B, :]            # (B, E) bf16, lanes >= DE are 0
    ext_h = jnp.maximum(
        jnp.dot(ext, w_ref[OFF_WE:OFF_WE + E, :], preferred_element_type=f32)
        + b_ref[1:2, :], 0.0)                     # (B, 128), lanes >= EH are 0

    # torch.cat([last_hidden, ext_h], 1) @ W1.T == h @ W1[:, :H].T + ext_h @ W1[:, H:].T
    z1 = (jnp.dot(h.astype(bf16), w_ref[OFF_W1H:OFF_W1H + H, :],
                  preferred_element_type=f32)
          + jnp.dot(ext_h[:, 0:EH].astype(bf16),
                    w_ref[OFF_W1E:OFF_W1E + EH, :], preferred_element_type=f32)
          + b_ref[2:3, :])                        # (B, 128), lanes >= MID are 0

    out = (jnp.dot(z1[:, 0:MID].astype(bf16), w_ref[OFF_W2:OFF_W2 + MID, :],
                   preferred_element_type=f32)
           + b_ref[3:4, :])                       # (B, 128)
    out_ref[...] = out[:, 0:C]


def fused_forward(mask, acts, w_all, b_all):
    vmem = pl.BlockSpec(memory_space=pltpu.MemorySpace.VMEM)
    return pl.pallas_call(
        fused_kernel,
        out_shape=jax.ShapeDtypeStruct((B, C), jnp.float32),
        in_specs=[vmem, vmem, vmem, vmem],
        out_specs=vmem,
    )(mask, acts, w_all, b_all)


# ------------------------------ full forward ----------------------------------
def moral_classifier_ext_forward(params, tokens, lens, exts):
    # Embedding gather + eval-mode dropouts (identity) stay in plain JAX.
    emb = params["embedding"][tokens]                          # (B, T, E) f32

    # ---- activations slab: time-major embeddings + padded exts, bf16 --------
    emb_tm = jnp.transpose(emb, (1, 0, 2)).reshape(T * B, E)   # row = t*B + b
    ext_pad = jnp.pad(exts, ((0, 0), (0, E - DE)))             # (B, E)
    acts = jnp.concatenate([emb_tm, ext_pad], axis=0).astype(jnp.bfloat16)

    # ---- packed-sequence validity mask (state frozen at t >= lens[b]) -------
    step_valid = (jnp.arange(T, dtype=jnp.int32)[:, None]
                  < lens.astype(jnp.int32)[None, :])           # (T, B) bool
    mask = jnp.broadcast_to(step_valid[:, :, None], (T, B, H)).astype(jnp.float32)

    # ---- weight slab: pre-transpose, fold tanh->sigmoid (g cols x2), bf16 ---
    gscale = jnp.ones((4 * H,), jnp.float32).at[2 * H:3 * H].set(2.0)
    w_ih_t = params["w_ih"].T * gscale                         # (E, 4H)
    w_hh_t = params["w_hh"].T * gscale                         # (H, 4H)
    b_lstm = ((params["b_ih"] + params["b_hh"]) * gscale).reshape(1, -1)

    def pad_lanes(a):
        return jnp.pad(a, ((0, 0), (0, LANES - a.shape[1])))

    we_t = jnp.pad(params["we"].T, ((0, E - DE), (0, 0)))      # (E, EH), rows DE: zero
    w1h_t = params["w1"][:, :H].T                              # (H, MID)
    w1e_t = params["w1"][:, H:].T                              # (EH, MID)
    w2_t = params["w2"].T                                      # (MID, C)

    w_all = jnp.concatenate(
        [w_ih_t, w_hh_t, pad_lanes(we_t), pad_lanes(w1h_t),
         pad_lanes(w1e_t), pad_lanes(w2_t)],
        axis=0).astype(jnp.bfloat16)                           # (192, 128) bf16

    # ---- bias slab (f32): b_lstm (g cols x2), be, b1, b2, lane-padded -------
    b_all = jnp.concatenate(
        [b_lstm,
         pad_lanes(params["be"].reshape(1, -1)),
         pad_lanes(params["b1"].reshape(1, -1)),
         pad_lanes(params["b2"].reshape(1, -1))],
        axis=0).astype(jnp.float32)                            # (4, 128) f32

    return fused_forward(mask, acts, w_all, b_all)             # (B, C)


# --------------------------- pure-JAX reference -------------------------------
def reference_forward(params, tokens, lens, exts):
    emb = params["embedding"][tokens]
    h = jnp.zeros((B, H), jnp.float32)
    c = jnp.zeros((B, H), jnp.float32)
    for t in range(T):
        x_t = emb[:, t, :]
        gates = (x_t @ params["w_ih"].T + h @ params["w_hh"].T
                 + params["b_ih"] + params["b_hh"])
        i_g = jax.nn.sigmoid(gates[:, :H])
        f_g = jax.nn.sigmoid(gates[:, H:2 * H])
        g_g = jnp.tanh(gates[:, 2 * H:3 * H])
        o_g = jax.nn.sigmoid(gates[:, 3 * H:])
        c_new = f_g * c + i_g * g_g
        h_new = o_g * jnp.tanh(c_new)
        valid = (t < lens)[:, None]
        c = jnp.where(valid, c_new, c)
        h = jnp.where(valid, h_new, h)
    ext_h = jax.nn.relu(exts @ params["we"].T + params["be"])
    lin_in = jnp.concatenate([h, ext_h], axis=1)
    z1 = lin_in @ params["w1"].T + params["b1"]
    return z1 @ params["w2"].T + params["b2"]


# ----------------------------------- main --------------------------------------
if __name__ == "__main__":
    key = jax.random.PRNGKey(0)
    ks = jax.random.split(key, 12)

    params = {
        "embedding": jax.random.normal(ks[0], (V, E), jnp.float32) * 0.1,
        "w_ih": jax.random.normal(ks[1], (4 * H, E), jnp.float32) * 0.1,
        "w_hh": jax.random.normal(ks[2], (4 * H, H), jnp.float32) * 0.1,
        "b_ih": jax.random.normal(ks[3], (4 * H,), jnp.float32) * 0.1,
        "b_hh": jax.random.normal(ks[4], (4 * H,), jnp.float32) * 0.1,
        "we": jax.random.normal(ks[5], (EH, DE), jnp.float32) * 0.1,       # ext_linears[0]
        "be": jax.random.normal(ks[6], (EH,), jnp.float32) * 0.1,
        "w1": jax.random.normal(ks[7], (MID, H + EH), jnp.float32) * 0.1,  # linears[0]
        "b1": jax.random.normal(ks[8], (MID,), jnp.float32) * 0.1,
        "w2": jax.random.normal(ks[9], (C, MID), jnp.float32) * 0.1,       # linears[1]
        "b2": jax.random.normal(ks[10], (C,), jnp.float32) * 0.1,
    }

    tokens = jax.random.randint(ks[11], (B, T), 0, V, dtype=jnp.int32)
    lens = jnp.array([T, 5], dtype=jnp.int32)          # variable-length sequences
    exts = jax.random.normal(jax.random.PRNGKey(42), (B, DE), jnp.float32)

    out = moral_classifier_ext_forward(params, tokens, lens, exts)
    out = jax.block_until_ready(out)

    ref = reference_forward(params, tokens, lens, exts)
    np.testing.assert_allclose(np.asarray(out), np.asarray(ref),
                               rtol=1e-3, atol=1e-3)

    print("KERNEL_OK")
</pallas_src>

<mosaic_0001>
module attributes {stable_mosaic.version = 11 : i64} {
  func.func @fused_kernel(%arg0: memref<8x2x32xf32, #tpu.memory_space<vmem>>, %arg1: memref<18x32xbf16, #tpu.memory_space<vmem>>, %arg2: memref<192x128xbf16, #tpu.memory_space<vmem>>, %arg3: memref<4x128xf32, #tpu.memory_space<vmem>>, %arg4: memref<2x11xf32, #tpu.memory_space<vmem>>) attributes {dimension_semantics = [], scalar_prefetch = 0 : i64, scratch_operands = 0 : i64, tpu.core_type = #tpu.core_type<tc>} {
    %c0 = arith.constant 0 : index
    %c0_0 = arith.constant 0 : index
    %0 = vector.load %arg2[%c0, %c0_0] : memref<192x128xbf16, #tpu.memory_space<vmem>>, vector<32x128xbf16>
    %c32 = arith.constant 32 : index
    %c0_1 = arith.constant 0 : index
    %1 = vector.load %arg2[%c32, %c0_1] : memref<192x128xbf16, #tpu.memory_space<vmem>>, vector<32x128xbf16>
    %c0_2 = arith.constant 0 : index
    %c0_3 = arith.constant 0 : index
    %2 = vector.load %arg1[%c0_2, %c0_3] : memref<18x32xbf16, #tpu.memory_space<vmem>>, vector<16x32xbf16>
    %cst = arith.constant dense<0.000000e+00> : vector<16x128xf32>
    %3 = tpu.matmul %2, %0, %cst {dimension_numbers = #tpu.dot_dimension_numbers<[1], [0], [0], [1], [0, 0, 1, 1], [], []>} : vector<16x32xbf16>, vector<32x128xbf16>, vector<16x128xf32> -> vector<16x128xf32>
    %c0_4 = arith.constant 0 : index
    %c0_5 = arith.constant 0 : index
    %4 = vector.load %arg3[%c0_4, %c0_5] : memref<4x128xf32, #tpu.memory_space<vmem>>, vector<1x128xf32>
    %5 = vector.broadcast %4 : vector<1x128xf32> to vector<16x128xf32>
    %6 = arith.addf %3, %5 : vector<16x128xf32>
    %7 = vector.shape_cast %6 : vector<16x128xf32> to vector<8x2x128xf32>
    %c0_6 = arith.constant 0 : index
    %c0_7 = arith.constant 0 : index
    %c0_8 = arith.constant 0 : index
    %8 = vector.load %arg0[%c0_6, %c0_7, %c0_8] : memref<8x2x32xf32, #tpu.memory_space<vmem>>, vector<8x2x32xf32>
    %cst_9 = arith.constant 5.000000e-01 : f32
    %9 = vector.broadcast %cst_9 : f32 to vector<8x2x32xf32>
    %10 = arith.cmpf ogt, %8, %9 : vector<8x2x32xf32>
    %cst_10 = arith.constant 0.000000e+00 : f32
    %11 = vector.broadcast %cst_10 : f32 to vector<2x32xf32>
    %cst_11 = arith.constant 0.000000e+00 : f32
    %12 = vector.broadcast %cst_11 : f32 to vector<2x32xf32>
    %13 = vector.extract_strided_slice %7 {offsets = [0, 0, 0], sizes = [1, 2, 128], strides = [1, 1, 1]} : vector<8x2x128xf32> to vector<1x2x128xf32>
    %14 = vector.shape_cast %13 : vector<1x2x128xf32> to vector<2x128xf32>
    %15 = arith.truncf %11 : vector<2x32xf32> to vector<2x32xbf16>
    %cst_12 = arith.constant dense<0.000000e+00> : vector<2x128xf32>
    %16 = tpu.matmul %15, %1, %cst_12 {dimension_numbers = #tpu.dot_dimension_numbers<[1], [0], [0], [1], [0, 0, 1, 1], [], []>} : vector<2x32xbf16>, vector<32x128xbf16>, vector<2x128xf32> -> vector<2x128xf32>
    %17 = arith.addf %14, %16 : vector<2x128xf32>
    %18 = arith.negf %17 : vector<2x128xf32>
    %19 = math.exp %18 : vector<2x128xf32>
    %cst_13 = arith.constant 1.000000e+00 : f32
    %20 = vector.broadcast %cst_13 : f32 to vector<2x128xf32>
    %21 = arith.addf %20, %19 : vector<2x128xf32>
    %22 = arith.divf %20, %21 : vector<2x128xf32>
    %23 = vector.extract_strided_slice %22 {offsets = [0, 0], sizes = [2, 32], strides = [1, 1]} : vector<2x128xf32> to vector<2x32xf32>
    %24 = vector.extract_strided_slice %22 {offsets = [0, 32], sizes = [2, 32], strides = [1, 1]} : vector<2x128xf32> to vector<2x32xf32>
    %25 = vector.extract_strided_slice %22 {offsets = [0, 64], sizes = [2, 32], strides = [1, 1]} : vector<2x128xf32> to vector<2x32xf32>
    %cst_14 = arith.constant 2.000000e+00 : f32
    %26 = vector.broadcast %cst_14 : f32 to vector<2x32xf32>
    %27 = arith.mulf %26, %25 : vector<2x32xf32>
    %cst_15 = arith.constant 1.000000e+00 : f32
    %28 = vector.broadcast %cst_15 : f32 to vector<2x32xf32>
    %29 = arith.subf %27, %28 : vector<2x32xf32>
    %30 = vector.extract_strided_slice %22 {offsets = [0, 96], sizes = [2, 32], strides = [1, 1]} : vector<2x128xf32> to vector<2x32xf32>
    %31 = arith.mulf %24, %12 : vector<2x32xf32>
    %32 = arith.mulf %23, %29 : vector<2x32xf32>
    %33 = arith.addf %31, %32 : vector<2x32xf32>
    %34 = math.tanh %33 : vector<2x32xf32>
    %35 = arith.mulf %30, %34 : vector<2x32xf32>
    %36 = vector.extract_strided_slice %10 {offsets = [0, 0, 0], sizes = [1, 2, 32], strides = [1, 1, 1]} : vector<8x2x32xi1> to vector<1x2x32xi1>
    %37 = vector.shape_cast %36 : vector<1x2x32xi1> to vector<2x32xi1>
    %38 = arith.select %37, %33, %12 : vector<2x32xi1>, vector<2x32xf32>
    %39 = arith.select %37, %35, %11 : vector<2x32xi1>, vector<2x32xf32>
    %40 = vector.extract_strided_slice %7 {offsets = [1, 0, 0], sizes = [1, 2, 128], strides = [1, 1, 1]} : vector<8x2x128xf32> to vector<1x2x128xf32>
    %41 = vector.shape_cast %40 : vector<1x2x128xf32> to vector<2x128xf32>
    %42 = arith.truncf %39 : vector<2x32xf32> to vector<2x32xbf16>
    %cst_16 = arith.constant dense<0.000000e+00> : vector<2x128xf32>
    %43 = tpu.matmul %42, %1, %cst_16 {dimension_numbers = #tpu.dot_dimension_numbers<[1], [0], [0], [1], [0, 0, 1, 1], [], []>} : vector<2x32xbf16>, vector<32x128xbf16>, vector<2x128xf32> -> vector<2x128xf32>
    %44 = arith.addf %41, %43 : vector<2x128xf32>
    %45 = arith.negf %44 : vector<2x128xf32>
    %46 = math.exp %45 : vector<2x128xf32>
    %cst_17 = arith.constant 1.000000e+00 : f32
    %47 = vector.broadcast %cst_17 : f32 to vector<2x128xf32>
    %48 = arith.addf %47, %46 : vector<2x128xf32>
    %49 = arith.divf %47, %48 : vector<2x128xf32>
    %50 = vector.extract_strided_slice %49 {offsets = [0, 0], sizes = [2, 32], strides = [1, 1]} : vector<2x128xf32> to vector<2x32xf32>
    %51 = vector.extract_strided_slice %49 {offsets = [0, 32], sizes = [2, 32], strides = [1, 1]} : vector<2x128xf32> to vector<2x32xf32>
    %52 = vector.extract_strided_slice %49 {offsets = [0, 64], sizes = [2, 32], strides = [1, 1]} : vector<2x128xf32> to vector<2x32xf32>
    %cst_18 = arith.constant 2.000000e+00 : f32
    %53 = vector.broadcast %cst_18 : f32 to vector<2x32xf32>
    %54 = arith.mulf %53, %52 : vector<2x32xf32>
    %cst_19 = arith.constant 1.000000e+00 : f32
    %55 = vector.broadcast %cst_19 : f32 to vector<2x32xf32>
    %56 = arith.subf %54, %55 : vector<2x32xf32>
    %57 = vector.extract_strided_slice %49 {offsets = [0, 96], sizes = [2, 32], strides = [1, 1]} : vector<2x128xf32> to vector<2x32xf32>
    %58 = arith.mulf %51, %38 : vector<2x32xf32>
    %59 = arith.mulf %50, %56 : vector<2x32xf32>
    %60 = arith.addf %58, %59 : vector<2x32xf32>
    %61 = math.tanh %60 : vector<2x32xf32>
    %62 = arith.mulf %57, %61 : vector<2x32xf32>
    %63 = vector.extract_strided_slice %10 {offsets = [1, 0, 0], sizes = [1, 2, 32], strides = [1, 1, 1]} : vector<8x2x32xi1> to vector<1x2x32xi1>
    %64 = vector.shape_cast %63 : vector<1x2x32xi1> to vector<2x32xi1>
    %65 = arith.select %64, %60, %38 : vector<2x32xi1>, vector<2x32xf32>
    %66 = arith.select %64, %62, %39 : vector<2x32xi1>, vector<2x32xf32>
    %67 = vector.extract_strided_slice %7 {offsets = [2, 0, 0], sizes = [1, 2, 128], strides = [1, 1, 1]} : vector<8x2x128xf32> to vector<1x2x128xf32>
    %68 = vector.shape_cast %67 : vector<1x2x128xf32> to vector<2x128xf32>
    %69 = arith.truncf %66 : vector<2x32xf32> to vector<2x32xbf16>
    %cst_20 = arith.constant dense<0.000000e+00> : vector<2x128xf32>
    %70 = tpu.matmul %69, %1, %cst_20 {dimension_numbers = #tpu.dot_dimension_numbers<[1], [0], [0], [1], [0, 0, 1, 1], [], []>} : vector<2x32xbf16>, vector<32x128xbf16>, vector<2x128xf32> -> vector<2x128xf32>
    %71 = arith.addf %68, %70 : vector<2x128xf32>
    %72 = arith.negf %71 : vector<2x128xf32>
    %73 = math.exp %72 : vector<2x128xf32>
    %cst_21 = arith.constant 1.000000e+00 : f32
    %74 = vector.broadcast %cst_21 : f32 to vector<2x128xf32>
    %75 = arith.addf %74, %73 : vector<2x128xf32>
    %76 = arith.divf %74, %75 : vector<2x128xf32>
    %77 = vector.extract_strided_slice %76 {offsets = [0, 0], sizes = [2, 32], strides = [1, 1]} : vector<2x128xf32> to vector<2x32xf32>
    %78 = vector.extract_strided_slice %76 {offsets = [0, 32], sizes = [2, 32], strides = [1, 1]} : vector<2x128xf32> to vector<2x32xf32>
    %79 = vector.extract_strided_slice %76 {offsets = [0, 64], sizes = [2, 32], strides = [1, 1]} : vector<2x128xf32> to vector<2x32xf32>
    %cst_22 = arith.constant 2.000000e+00 : f32
    %80 = vector.broadcast %cst_22 : f32 to vector<2x32xf32>
    %81 = arith.mulf %80, %79 : vector<2x32xf32>
    %cst_23 = arith.constant 1.000000e+00 : f32
    %82 = vector.broadcast %cst_23 : f32 to vector<2x32xf32>
    %83 = arith.subf %81, %82 : vector<2x32xf32>
    %84 = vector.extract_strided_slice %76 {offsets = [0, 96], sizes = [2, 32], strides = [1, 1]} : vector<2x128xf32> to vector<2x32xf32>
    %85 = arith.mulf %78, %65 : vector<2x32xf32>
    %86 = arith.mulf %77, %83 : vector<2x32xf32>
    %87 = arith.addf %85, %86 : vector<2x32xf32>
    %88 = math.tanh %87 : vector<2x32xf32>
    %89 = arith.mulf %84, %88 : vector<2x32xf32>
    %90 = vector.extract_strided_slice %10 {offsets = [2, 0, 0], sizes = [1, 2, 32], strides = [1, 1, 1]} : vector<8x2x32xi1> to vector<1x2x32xi1>
    %91 = vector.shape_cast %90 : vector<1x2x32xi1> to vector<2x32xi1>
    %92 = arith.select %91, %87, %65 : vector<2x32xi1>, vector<2x32xf32>
    %93 = arith.select %91, %89, %66 : vector<2x32xi1>, vector<2x32xf32>
    %94 = vector.extract_strided_slice %7 {offsets = [3, 0, 0], sizes = [1, 2, 128], strides = [1, 1, 1]} : vector<8x2x128xf32> to vector<1x2x128xf32>
    %95 = vector.shape_cast %94 : vector<1x2x128xf32> to vector<2x128xf32>
    %96 = arith.truncf %93 : vector<2x32xf32> to vector<2x32xbf16>
    %cst_24 = arith.constant dense<0.000000e+00> : vector<2x128xf32>
    %97 = tpu.matmul %96, %1, %cst_24 {dimension_numbers = #tpu.dot_dimension_numbers<[1], [0], [0], [1], [0, 0, 1, 1], [], []>} : vector<2x32xbf16>, vector<32x128xbf16>, vector<2x128xf32> -> vector<2x128xf32>
    %98 = arith.addf %95, %97 : vector<2x128xf32>
    %99 = arith.negf %98 : vector<2x128xf32>
    %100 = math.exp %99 : vector<2x128xf32>
    %cst_25 = arith.constant 1.000000e+00 : f32
    %101 = vector.broadcast %cst_25 : f32 to vector<2x128xf32>
    %102 = arith.addf %101, %100 : vector<2x128xf32>
    %103 = arith.divf %101, %102 : vector<2x128xf32>
    %104 = vector.extract_strided_slice %103 {offsets = [0, 0], sizes = [2, 32], strides = [1, 1]} : vector<2x128xf32> to vector<2x32xf32>
    %105 = vector.extract_strided_slice %103 {offsets = [0, 32], sizes = [2, 32], strides = [1, 1]} : vector<2x128xf32> to vector<2x32xf32>
    %106 = vector.extract_strided_slice %103 {offsets = [0, 64], sizes = [2, 32], strides = [1, 1]} : vector<2x128xf32> to vector<2x32xf32>
    %cst_26 = arith.constant 2.000000e+00 : f32
    %107 = vector.broadcast %cst_26 : f32 to vector<2x32xf32>
    %108 = arith.mulf %107, %106 : vector<2x32xf32>
    %cst_27 = arith.constant 1.000000e+00 : f32
    %109 = vector.broadcast %cst_27 : f32 to vector<2x32xf32>
    %110 = arith.subf %108, %109 : vector<2x32xf32>
    %111 = vector.extract_strided_slice %103 {offsets = [0, 96], sizes = [2, 32], strides = [1, 1]} : vector<2x128xf32> to vector<2x32xf32>
    %112 = arith.mulf %105, %92 : vector<2x32xf32>
    %113 = arith.mulf %104, %110 : vector<2x32xf32>
    %114 = arith.addf %112, %113 : vector<2x32xf32>
    %115 = math.tanh %114 : vector<2x32xf32>
    %116 = arith.mulf %111, %115 : vector<2x32xf32>
    %117 = vector.extract_strided_slice %10 {offsets = [3, 0, 0], sizes = [1, 2, 32], strides = [1, 1, 1]} : vector<8x2x32xi1> to vector<1x2x32xi1>
    %118 = vector.shape_cast %117 : vector<1x2x32xi1> to vector<2x32xi1>
    %119 = arith.select %118, %114, %92 : vector<2x32xi1>, vector<2x32xf32>
    %120 = arith.select %118, %116, %93 : vector<2x32xi1>, vector<2x32xf32>
    %121 = vector.extract_strided_slice %7 {offsets = [4, 0, 0], sizes = [1, 2, 128], strides = [1, 1, 1]} : vector<8x2x128xf32> to vector<1x2x128xf32>
    %122 = vector.shape_cast %121 : vector<1x2x128xf32> to vector<2x128xf32>
    %123 = arith.truncf %120 : vector<2x32xf32> to vector<2x32xbf16>
    %cst_28 = arith.constant dense<0.000000e+00> : vector<2x128xf32>
    %124 = tpu.matmul %123, %1, %cst_28 {dimension_numbers = #tpu.dot_dimension_numbers<[1], [0], [0], [1], [0, 0, 1, 1], [], []>} : vector<2x32xbf16>, vector<32x128xbf16>, vector<2x128xf32> -> vector<2x128xf32>
    %125 = arith.addf %122, %124 : vector<2x128xf32>
    %126 = arith.negf %125 : vector<2x128xf32>
    %127 = math.exp %126 : vector<2x128xf32>
    %cst_29 = arith.constant 1.000000e+00 : f32
    %128 = vector.broadcast %cst_29 : f32 to vector<2x128xf32>
    %129 = arith.addf %128, %127 : vector<2x128xf32>
    %130 = arith.divf %128, %129 : vector<2x128xf32>
    %131 = vector.extract_strided_slice %130 {offsets = [0, 0], sizes = [2, 32], strides = [1, 1]} : vector<2x128xf32> to vector<2x32xf32>
    %132 = vector.extract_strided_slice %130 {offsets = [0, 32], sizes = [2, 32], strides = [1, 1]} : vector<2x128xf32> to vector<2x32xf32>
    %133 = vector.extract_strided_slice %130 {offsets = [0, 64], sizes = [2, 32], strides = [1, 1]} : vector<2x128xf32> to vector<2x32xf32>
    %cst_30 = arith.constant 2.000000e+00 : f32
    %134 = vector.broadcast %cst_30 : f32 to vector<2x32xf32>
    %135 = arith.mulf %134, %133 : vector<2x32xf32>
    %cst_31 = arith.constant 1.000000e+00 : f32
    %136 = vector.broadcast %cst_31 : f32 to vector<2x32xf32>
    %137 = arith.subf %135, %136 : vector<2x32xf32>
    %138 = vector.extract_strided_slice %130 {offsets = [0, 96], sizes = [2, 32], strides = [1, 1]} : vector<2x128xf32> to vector<2x32xf32>
    %139 = arith.mulf %132, %119 : vector<2x32xf32>
    %140 = arith.mulf %131, %137 : vector<2x32xf32>
    %141 = arith.addf %139, %140 : vector<2x32xf32>
    %142 = math.tanh %141 : vector<2x32xf32>
    %143 = arith.mulf %138, %142 : vector<2x32xf32>
    %144 = vector.extract_strided_slice %10 {offsets = [4, 0, 0], sizes = [1, 2, 32], strides = [1, 1, 1]} : vector<8x2x32xi1> to vector<1x2x32xi1>
    %145 = vector.shape_cast %144 : vector<1x2x32xi1> to vector<2x32xi1>
    %146 = arith.select %145, %141, %119 : vector<2x32xi1>, vector<2x32xf32>
    %147 = arith.select %145, %143, %120 : vector<2x32xi1>, vector<2x32xf32>
    %148 = vector.extract_strided_slice %7 {offsets = [5, 0, 0], sizes = [1, 2, 128], strides = [1, 1, 1]} : vector<8x2x128xf32> to vector<1x2x128xf32>
    %149 = vector.shape_cast %148 : vector<1x2x128xf32> to vector<2x128xf32>
    %150 = arith.truncf %147 : vector<2x32xf32> to vector<2x32xbf16>
    %cst_32 = arith.constant dense<0.000000e+00> : vector<2x128xf32>
    %151 = tpu.matmul %150, %1, %cst_32 {dimension_numbers = #tpu.dot_dimension_numbers<[1], [0], [0], [1], [0, 0, 1, 1], [], []>} : vector<2x32xbf16>, vector<32x128xbf16>, vector<2x128xf32> -> vector<2x128xf32>
    %152 = arith.addf %149, %151 : vector<2x128xf32>
    %153 = arith.negf %152 : vector<2x128xf32>
    %154 = math.exp %153 : vector<2x128xf32>
    %cst_33 = arith.constant 1.000000e+00 : f32
    %155 = vector.broadcast %cst_33 : f32 to vector<2x128xf32>
    %156 = arith.addf %155, %154 : vector<2x128xf32>
    %157 = arith.divf %155, %156 : vector<2x128xf32>
    %158 = vector.extract_strided_slice %157 {offsets = [0, 0], sizes = [2, 32], strides = [1, 1]} : vector<2x128xf32> to vector<2x32xf32>
    %159 = vector.extract_strided_slice %157 {offsets = [0, 32], sizes = [2, 32], strides = [1, 1]} : vector<2x128xf32> to vector<2x32xf32>
    %160 = vector.extract_strided_slice %157 {offsets = [0, 64], sizes = [2, 32], strides = [1, 1]} : vector<2x128xf32> to vector<2x32xf32>
    %cst_34 = arith.constant 2.000000e+00 : f32
    %161 = vector.broadcast %cst_34 : f32 to vector<2x32xf32>
    %162 = arith.mulf %161, %160 : vector<2x32xf32>
    %cst_35 = arith.constant 1.000000e+00 : f32
    %163 = vector.broadcast %cst_35 : f32 to vector<2x32xf32>
    %164 = arith.subf %162, %163 : vector<2x32xf32>
    %165 = vector.extract_strided_slice %157 {offsets = [0, 96], sizes = [2, 32], strides = [1, 1]} : vector<2x128xf32> to vector<2x32xf32>
    %166 = arith.mulf %159, %146 : vector<2x32xf32>
    %167 = arith.mulf %158, %164 : vector<2x32xf32>
    %168 = arith.addf %166, %167 : vector<2x32xf32>
    %169 = math.tanh %168 : vector<2x32xf32>
    %170 = arith.mulf %165, %169 : vector<2x32xf32>
    %171 = vector.extract_strided_slice %10 {offsets = [5, 0, 0], sizes = [1, 2, 32], strides = [1, 1, 1]} : vector<8x2x32xi1> to vector<1x2x32xi1>
    %172 = vector.shape_cast %171 : vector<1x2x32xi1> to vector<2x32xi1>
    %173 = arith.select %172, %168, %146 : vector<2x32xi1>, vector<2x32xf32>
    %174 = arith.select %172, %170, %147 : vector<2x32xi1>, vector<2x32xf32>
    %175 = vector.extract_strided_slice %7 {offsets = [6, 0, 0], sizes = [1, 2, 128], strides = [1, 1, 1]} : vector<8x2x128xf32> to vector<1x2x128xf32>
    %176 = vector.shape_cast %175 : vector<1x2x128xf32> to vector<2x128xf32>
    %177 = arith.truncf %174 : vector<2x32xf32> to vector<2x32xbf16>
    %cst_36 = arith.constant dense<0.000000e+00> : vector<2x128xf32>
    %178 = tpu.matmul %177, %1, %cst_36 {dimension_numbers = #tpu.dot_dimension_numbers<[1], [0], [0], [1], [0, 0, 1, 1], [], []>} : vector<2x32xbf16>, vector<32x128xbf16>, vector<2x128xf32> -> vector<2x128xf32>
    %179 = arith.addf %176, %178 : vector<2x128xf32>
    %180 = arith.negf %179 : vector<2x128xf32>
    %181 = math.exp %180 : vector<2x128xf32>
    %cst_37 = arith.constant 1.000000e+00 : f32
    %182 = vector.broadcast %cst_37 : f32 to vector<2x128xf32>
    %183 = arith.addf %182, %181 : vector<2x128xf32>
    %184 = arith.divf %182, %183 : vector<2x128xf32>
    %185 = vector.extract_strided_slice %184 {offsets = [0, 0], sizes = [2, 32], strides = [1, 1]} : vector<2x128xf32> to vector<2x32xf32>
    %186 = vector.extract_strided_slice %184 {offsets = [0, 32], sizes = [2, 32], strides = [1, 1]} : vector<2x128xf32> to vector<2x32xf32>
    %187 = vector.extract_strided_slice %184 {offsets = [0, 64], sizes = [2, 32], strides = [1, 1]} : vector<2x128xf32> to vector<2x32xf32>
    %cst_38 = arith.constant 2.000000e+00 : f32
    %188 = vector.broadcast %cst_38 : f32 to vector<2x32xf32>
    %189 = arith.mulf %188, %187 : vector<2x32xf32>
    %cst_39 = arith.constant 1.000000e+00 : f32
    %190 = vector.broadcast %cst_39 : f32 to vector<2x32xf32>
    %191 = arith.subf %189, %190 : vector<2x32xf32>
    %192 = vector.extract_strided_slice %184 {offsets = [0, 96], sizes = [2, 32], strides = [1, 1]} : vector<2x128xf32> to vector<2x32xf32>
    %193 = arith.mulf %186, %173 : vector<2x32xf32>
    %194 = arith.mulf %185, %191 : vector<2x32xf32>
    %195 = arith.addf %193, %194 : vector<2x32xf32>
    %196 = math.tanh %195 : vector<2x32xf32>
    %197 = arith.mulf %192, %196 : vector<2x32xf32>
    %198 = vector.extract_strided_slice %10 {offsets = [6, 0, 0], sizes = [1, 2, 32], strides = [1, 1, 1]} : vector<8x2x32xi1> to vector<1x2x32xi1>
    %199 = vector.shape_cast %198 : vector<1x2x32xi1> to vector<2x32xi1>
    %200 = arith.select %199, %195, %173 : vector<2x32xi1>, vector<2x32xf32>
    %201 = arith.select %199, %197, %174 : vector<2x32xi1>, vector<2x32xf32>
    %202 = vector.extract_strided_slice %7 {offsets = [7, 0, 0], sizes = [1, 2, 128], strides = [1, 1, 1]} : vector<8x2x128xf32> to vector<1x2x128xf32>
    %203 = vector.shape_cast %202 : vector<1x2x128xf32> to vector<2x128xf32>
    %204 = arith.truncf %201 : vector<2x32xf32> to vector<2x32xbf16>
    %cst_40 = arith.constant dense<0.000000e+00> : vector<2x128xf32>
    %205 = tpu.matmul %204, %1, %cst_40 {dimension_numbers = #tpu.dot_dimension_numbers<[1], [0], [0], [1], [0, 0, 1, 1], [], []>} : vector<2x32xbf16>, vector<32x128xbf16>, vector<2x128xf32> -> vector<2x128xf32>
    %206 = arith.addf %203, %205 : vector<2x128xf32>
    %207 = arith.negf %206 : vector<2x128xf32>
    %208 = math.exp %207 : vector<2x128xf32>
    %cst_41 = arith.constant 1.000000e+00 : f32
    %209 = vector.broadcast %cst_41 : f32 to vector<2x128xf32>
    %210 = arith.addf %209, %208 : vector<2x128xf32>
    %211 = arith.divf %209, %210 : vector<2x128xf32>
    %212 = vector.extract_strided_slice %211 {offsets = [0, 0], sizes = [2, 32], strides = [1, 1]} : vector<2x128xf32> to vector<2x32xf32>
    %213 = vector.extract_strided_slice %211 {offsets = [0, 32], sizes = [2, 32], strides = [1, 1]} : vector<2x128xf32> to vector<2x32xf32>
    %214 = vector.extract_strided_slice %211 {offsets = [0, 64], sizes = [2, 32], strides = [1, 1]} : vector<2x128xf32> to vector<2x32xf32>
    %cst_42 = arith.constant 2.000000e+00 : f32
    %215 = vector.broadcast %cst_42 : f32 to vector<2x32xf32>
    %216 = arith.mulf %215, %214 : vector<2x32xf32>
    %cst_43 = arith.constant 1.000000e+00 : f32
    %217 = vector.broadcast %cst_43 : f32 to vector<2x32xf32>
    %218 = arith.subf %216, %217 : vector<2x32xf32>
    %219 = vector.extract_strided_slice %211 {offsets = [0, 96], sizes = [2, 32], strides = [1, 1]} : vector<2x128xf32> to vector<2x32xf32>
    %220 = arith.mulf %213, %200 : vector<2x32xf32>
    %221 = arith.mulf %212, %218 : vector<2x32xf32>
    %222 = arith.addf %220, %221 : vector<2x32xf32>
    %223 = math.tanh %222 : vector<2x32xf32>
    %224 = arith.mulf %219, %223 : vector<2x32xf32>
    %225 = vector.extract_strided_slice %10 {offsets = [7, 0, 0], sizes = [1, 2, 32], strides = [1, 1, 1]} : vector<8x2x32xi1> to vector<1x2x32xi1>
    %226 = vector.shape_cast %225 : vector<1x2x32xi1> to vector<2x32xi1>
    %227 = arith.select %226, %224, %201 : vector<2x32xi1>, vector<2x32xf32>
    %c16 = arith.constant 16 : index
    %c0_44 = arith.constant 0 : index
    %228 = vector.load %arg1[%c16, %c0_44] : memref<18x32xbf16, #tpu.memory_space<vmem>>, vector<2x32xbf16>
    %c64 = arith.constant 64 : index
    %c0_45 = arith.constant 0 : index
    %229 = vector.load %arg2[%c64, %c0_45] : memref<192x128xbf16, #tpu.memory_space<vmem>>, vector<32x128xbf16>
    %cst_46 = arith.constant dense<0.000000e+00> : vector<2x128xf32>
    %230 = tpu.matmul %228, %229, %cst_46 {dimension_numbers = #tpu.dot_dimension_numbers<[1], [0], [0], [1], [0, 0, 1, 1], [], []>} : vector<2x32xbf16>, vector<32x128xbf16>, vector<2x128xf32> -> vector<2x128xf32>
    %c1 = arith.constant 1 : index
    %c0_47 = arith.constant 0 : index
    %231 = vector.load %arg3[%c1, %c0_47] : memref<4x128xf32, #tpu.memory_space<vmem>>, vector<1x128xf32>
    %232 = vector.broadcast %231 : vector<1x128xf32> to vector<2x128xf32>
    %233 = arith.addf %230, %232 : vector<2x128xf32>
    %cst_48 = arith.constant 0.000000e+00 : f32
    %234 = vector.broadcast %cst_48 : f32 to vector<2x128xf32>
    %235 = arith.maximumf %233, %234 : vector<2x128xf32>
    %236 = arith.truncf %227 : vector<2x32xf32> to vector<2x32xbf16>
    %c96 = arith.constant 96 : index
    %c0_49 = arith.constant 0 : index
    %237 = vector.load %arg2[%c96, %c0_49] : memref<192x128xbf16, #tpu.memory_space<vmem>>, vector<32x128xbf16>
    %cst_50 = arith.constant dense<0.000000e+00> : vector<2x128xf32>
    %238 = tpu.matmul %236, %237, %cst_50 {dimension_numbers = #tpu.dot_dimension_numbers<[1], [0], [0], [1], [0, 0, 1, 1], [], []>} : vector<2x32xbf16>, vector<32x128xbf16>, vector<2x128xf32> -> vector<2x128xf32>
    %239 = vector.extract_strided_slice %235 {offsets = [0, 0], sizes = [2, 32], strides = [1, 1]} : vector<2x128xf32> to vector<2x32xf32>
    %240 = arith.truncf %239 : vector<2x32xf32> to vector<2x32xbf16>
    %c128 = arith.constant 128 : index
    %c0_51 = arith.constant 0 : index
    %241 = vector.load %arg2[%c128, %c0_51] : memref<192x128xbf16, #tpu.memory_space<vmem>>, vector<32x128xbf16>
    %cst_52 = arith.constant dense<0.000000e+00> : vector<2x128xf32>
    %242 = tpu.matmul %240, %241, %cst_52 {dimension_numbers = #tpu.dot_dimension_numbers<[1], [0], [0], [1], [0, 0, 1, 1], [], []>} : vector<2x32xbf16>, vector<32x128xbf16>, vector<2x128xf32> -> vector<2x128xf32>
    %243 = arith.addf %238, %242 : vector<2x128xf32>
    %c2 = arith.constant 2 : index
    %c0_53 = arith.constant 0 : index
    %244 = vector.load %arg3[%c2, %c0_53] : memref<4x128xf32, #tpu.memory_space<vmem>>, vector<1x128xf32>
    %245 = vector.broadcast %244 : vector<1x128xf32> to vector<2x128xf32>
    %246 = arith.addf %243, %245 : vector<2x128xf32>
    %247 = vector.extract_strided_slice %246 {offsets = [0, 0], sizes = [2, 32], strides = [1, 1]} : vector<2x128xf32> to vector<2x32xf32>
    %248 = arith.truncf %247 : vector<2x32xf32> to vector<2x32xbf16>
    %c160 = arith.constant 160 : index
    %c0_54 = arith.constant 0 : index
    %249 = vector.load %arg2[%c160, %c0_54] : memref<192x128xbf16, #tpu.memory_space<vmem>>, vector<32x128xbf16>
    %cst_55 = arith.constant dense<0.000000e+00> : vector<2x128xf32>
    %250 = tpu.matmul %248, %249, %cst_55 {dimension_numbers = #tpu.dot_dimension_numbers<[1], [0], [0], [1], [0, 0, 1, 1], [], []>} : vector<2x32xbf16>, vector<32x128xbf16>, vector<2x128xf32> -> vector<2x128xf32>
    %c3 = arith.constant 3 : index
    %c0_56 = arith.constant 0 : index
    %251 = vector.load %arg3[%c3, %c0_56] : memref<4x128xf32, #tpu.memory_space<vmem>>, vector<1x128xf32>
    %252 = vector.broadcast %251 : vector<1x128xf32> to vector<2x128xf32>
    %253 = arith.addf %250, %252 : vector<2x128xf32>
    %254 = vector.extract_strided_slice %253 {offsets = [0, 0], sizes = [2, 11], strides = [1, 1]} : vector<2x128xf32> to vector<2x11xf32>
    %c0_57 = arith.constant 0 : index
    %c0_58 = arith.constant 0 : index
    %255 = vector.load %arg4[%c0_57, %c0_58] : memref<2x11xf32, #tpu.memory_space<vmem>>, vector<2x11xf32>
    tpu.vector_store %arg4[%c0_57, %c0_58], %254 {strides = array<i32>} : memref<2x11xf32, #tpu.memory_space<vmem>>, vector<2x11xf32>,
    return
  }
}

</mosaic_0001>

<llo_original>
// kernel: tpu_custom_call.1
$region0: #{tpu_custom_call.1}
  #allocation0 [shape = 'u32[]', space=smem, size = 0x4, offset = 0x4, fixed_abs, tag = 'smem constant byte address 0x4 - core index']
  #allocation1 [shape = 'u32[144,128]{1,0:T(1,128)}', space=vmem, size = 0x12000, scoped, tag = 'internal scratch']
  %s0 = inlined_call_operand.hbm [shape: f32[8,2,32], index: 0, kind: input, shape index: {}]
  %s1 = inlined_call_operand.hbm [shape: bf16[18,32], index: 1, kind: input, shape index: {}]
  %s2 = inlined_call_operand.hbm [shape: bf16[192,128], index: 2, kind: input, shape index: {}]
  %s3 = inlined_call_operand.vmem [shape: f32[4,128], index: 3, kind: input, shape index: {}]
  %s4 = inlined_call_operand.hbm [shape: f32[2,11], index: 4, kind: output, shape index: {}]
  %s5 = sld [smem:[#allocation0]]
  $region38: #{tpu_custom_call.1} parent=0
    _
  %s7 = ssub.s32 1, %s5
  %s8 = scalar_select 0, %s7, %s5
  $region1: #{tpu_custom_call.1} parent=0
    #allocation2 [shape = 'u8[8192]{0}', space=vmem, size = 0x2000, scoped, tag = 'input window, operand 0, single buffered']
    #allocation3 [shape = 's32[1]{0}', space=sflag, size = 0x4, scoped, tag = 'scoped memory for tpu_custom_call.1']
    #allocation4 [shape = 's32[1]{0}', space=sflag, size = 0x4, scoped, tag = 'scoped memory for tpu_custom_call.1']
    #allocation5 [shape = 'u8[6144]{0}', space=vmem, size = 0x1800, scoped, tag = 'input window, operand 1, single buffered']
    #allocation6 [shape = 's32[1]{0}', space=sflag, size = 0x4, scoped, tag = 'scoped memory for tpu_custom_call.1']
    #allocation7 [shape = 'u8[49152]{0}', space=vmem, size = 0xc000, scoped, tag = 'input window, operand 2, single buffered']
    #allocation8 [shape = 'u8[1024]{0}', space=vmem, size = 0x400, scoped, tag = 'output window, operand 0, single buffered']
    %9 = vsyncpa [#allocation3], 0
    %10 = vsyncpa [#allocation6], 0
    %11 = vsyncpa [#allocation4], 0
    // Predicated region
    $region2: #{tpu_custom_call.1} parent=1 // pred_check
      _
    $region3: #{tpu_custom_call.1} parent=1 // pred_check_branch
      %13 = sbr.rel (0) target = $region5
    $region4: #{tpu_custom_call.1} parent=1 // pred_region
      %s15 = ssub.s32 256, 256
      %16 = vsyncadd [#allocation3], %s15
      %s17 = sshll.u32 [#allocation2], 4
      %s18 = int_to_ptr.vmem [resolvable:$true] %s17
      %23 = dma.hbm_to_vmem [thread:$0]  %s0, 256, %s18, [#allocation3], 32, 32, 2
    $region5: #{tpu_custom_call.1} parent=1 // pred_fallthru
      _
    // Predicated region
    $region6: #{tpu_custom_call.1} parent=1 // pred_check
      _
    $region7: #{tpu_custom_call.1} parent=1 // pred_check_branch
      %25 = sbr.rel (0) target = $region9
    $region8: #{tpu_custom_call.1} parent=1 // pred_region
      %s27 = ssub.s32 192, 192
      %28 = vsyncadd [#allocation6], %s27
      %s29 = sshll.u32 [#allocation5], 4
      %s30 = int_to_ptr.vmem [resolvable:$true] %s29
      %35 = dma.hbm_to_vmem [thread:$0]  %s1, 192, %s30, [#allocation6], 64, 64, 4
    $region9: #{tpu_custom_call.1} parent=1 // pred_fallthru
      _
    // Predicated region
    $region10: #{tpu_custom_call.1} parent=1 // pred_check
      _
    $region11: #{tpu_custom_call.1} parent=1 // pred_check_branch
      %37 = sbr.rel (0) target = $region13
    $region12: #{tpu_custom_call.1} parent=1 // pred_region
      %s39 = ssub.s32 1536, 1536
      %40 = vsyncadd [#allocation6], %s39
      %s41 = sshll.u32 [#allocation7], 4
      %s42 = int_to_ptr.vmem [resolvable:$true] %s41
      %47 = dma.hbm_to_vmem [thread:$0]  %s2, 1536, %s42, [#allocation6], 64, 64, 4
    $region13: #{tpu_custom_call.1} parent=1 // pred_fallthru
      _
    // Predicated region
    $region14: #{tpu_custom_call.1} parent=1 // pred_check
      _
    $region15: #{tpu_custom_call.1} parent=1 // pred_check_branch
      %49 = sbr.rel (0) target = $region17
    $region16: #{tpu_custom_call.1} parent=1 // pred_region
      _
    $region17: #{tpu_custom_call.1} parent=1 // pred_fallthru
      _
    // Predicated region
    $region18: #{tpu_custom_call.1} parent=1 // pred_check
      _
    $region19: #{tpu_custom_call.1} parent=1 // pred_check_branch
      %51 = sbr.rel (0) target = $region21
    $region20: #{tpu_custom_call.1} parent=1 // pred_region
      %52 = dma.done [#allocation3], 256
    $region21: #{tpu_custom_call.1} parent=1 // pred_fallthru
      _
    // Predicated region
    $region22: #{tpu_custom_call.1} parent=1 // pred_check
      _
    $region23: #{tpu_custom_call.1} parent=1 // pred_check_branch
      %54 = sbr.rel (0) target = $region25
    $region24: #{tpu_custom_call.1} parent=1 // pred_region
      %55 = dma.done [#allocation6], 192
    $region25: #{tpu_custom_call.1} parent=1 // pred_fallthru
      _
    // Predicated region
    $region26: #{tpu_custom_call.1} parent=1 // pred_check
      _
    $region27: #{tpu_custom_call.1} parent=1 // pred_check_branch
      %57 = sbr.rel (0) target = $region29
    $region28: #{tpu_custom_call.1} parent=1 // pred_region
      %58 = dma.done [#allocation6], 1536
    $region29: #{tpu_custom_call.1} parent=1 // pred_fallthru
      _
    %v60 = vld [vmem:[#allocation7] sm:$0xf]
    %v61 = vld [vmem:[#allocation7 + $0x4] sm:$0xf]
    %v62 = vld [vmem:[#allocation7 + $0x8] sm:$0xf]
    %v63 = vld [vmem:[#allocation7 + $0xc] sm:$0xf]
    %v64 = vld [vmem:[#allocation7 + $0x10] sm:$0xf]
    %v65 = vld [vmem:[#allocation7 + $0x14] sm:$0xf]
    %v66 = vld [vmem:[#allocation7 + $0x18] sm:$0xf]
    %v67 = vld [vmem:[#allocation7 + $0x1c] sm:$0xf]
    %v68 = vld [vmem:[#allocation5] sm:$0xf]
    %v69 = vld [vmem:[#allocation5 + $0x4] sm:$0xf]
    %v70 = vld [vmem:[%s3] sm:$0x1]
    %v71 = vlaneseq
    %v72 = vshrl.u32 %v71, 7
    %v73 = vsub.s32 0, %v72
    %v74 = vrot.slane %v70, %v73
    %v77 = vunpack.c.l.b16 %v68
    %v78 = vunpack.c.l.b16 %v69
    %v79 = vpack.c.b16 %v78, %v77
    %v84 = vunpack.c.l.b16 %v60
    %v85 = vunpack.c.l.b16 %v61
    %v86 = vunpack.c.l.b16 %v62
    %v87 = vunpack.c.l.b16 %v63
    %v88 = vpack.c.b16 %v85, %v84
    %v89 = vpack.c.b16 %v87, %v86
    %vm92 = vcmask 261120
    %v94 = vsel %vm92, %v79, 0
    %96 = vmatprep.subr.bf16.mxu0 0
    %97 = vmatpush1.bf16.msra.mxu0 0
    %98 = vmatprep.subr.bf16.mxu0 0
    %99 = vmatpush1.bf16.msra.mxu0 0
    %100 = vmatprep.subr.bf16.mxu0 0
    %101 = vmatpush1.bf16.msra.mxu0 0
    %102 = vmatprep.subr.bf16.mxu0 0
    %103 = vmatpush1.bf16.msra.mxu0 0
    %104 = vmatprep.subr.bf16.mxu0 0
    %105 = vmatpush1.bf16.msra.mxu0 0
    %106 = vmatprep.subr.bf16.mxu0 0
    %107 = vmatpush1.bf16.msra.mxu0 0
    %108 = vmatprep.subr.bf16.mxu0 0
    %109 = vmatpush1.bf16.msra.mxu0 %v89
    %110 = vmatprep.subr.bf16.mxu0 0
    %111 = vmatpush1.bf16.msra.mxu0 %v88
    %112 = vmatprep.subr.bf16.mxu0 0
    %113 = vmatpush2.bf16.msra.mxu0 0
    %114 = vmatprep.subr.bf16.mxu0 0
    %115 = vmatpush2.bf16.msra.mxu0 0
    %116 = vmatprep.subr.bf16.mxu0 0
    %117 = vmatpush2.bf16.msra.mxu0 0
    %118 = vmatprep.subr.bf16.mxu0 0
    %119 = vmatpush2.bf16.msra.mxu0 0
    %120 = vmatprep.subr.bf16.mxu0 0
    %121 = vmatpush2.bf16.msra.mxu0 0
    %122 = vmatprep.subr.bf16.mxu0 0
    %123 = vmatpush2.bf16.msra.mxu0 0
    %124 = vmatprep.subr.bf16.mxu0 0
    %125 = vmatpush2.bf16.msra.mxu0 0
    %126 = vmatprep.subr.bf16.mxu0 0
    %127 = vmatpush2.bf16.msra.mxu0 0
    %128 = vmatprep.mubr.bf16.mxu0 0
    %129 = vmatmul.mubr.bf16.gmra.mxu0 %v94
    %v130 = vpop.f32.mrf.mxu0
    %v131 = vadd.f32 %v74, %v130
    %v132 = vpop.f32.mrf.mxu0
    %v133 = vpop.f32.mrf.mxu0
    %v134 = vadd.f32 %v74, %v133
    %v135 = vpop.f32.mrf.mxu0
    %136 = vdwg.mxu0
    %v139 = vcombine.high %v131, %v131
    %v141 = vunpack.c.l.s4 1983009808
    %v142 = vunpack.c.0.s8 %v141
    %v143 = vlaneseq
    %v144 = vshrl.u32 %v143, 7
    %v145 = vsub.s32 %v142, %v144
    %v146 = vrot.slane %v131, %v145
    %v148 = vunpack.c.l.s4 1983009808
    %v149 = vunpack.c.0.s8 %v148
    %v150 = vlaneseq
    %v151 = vshrl.u32 %v150, 7
    %v152 = vsub.s32 %v149, %v151
    %v153 = vrot.slane %v139, %v152
    %v154 = vcombine.high %v146, %v146
    %v155 = vcombine.high %v153, %v153
    %v156 = vcombine.high %v134, %v134
    %v158 = vunpack.c.l.s4 1983009808
    %v159 = vunpack.c.0.s8 %v158
    %v160 = vlaneseq
    %v161 = vshrl.u32 %v160, 7
    %v162 = vsub.s32 %v159, %v161
    %v163 = vrot.slane %v134, %v162
    %v165 = vunpack.c.l.s4 1983009808
    %v166 = vunpack.c.0.s8 %v165
    %v167 = vlaneseq
    %v168 = vshrl.u32 %v167, 7
    %v169 = vsub.s32 %v166, %v168
    %v170 = vrot.slane %v156, %v169
    %v171 = vcombine.high %v163, %v163
    %v172 = vcombine.high %v170, %v170
    %v181 = vld [vmem:[#allocation2] sm:$0x3]
    %v182 = vld [vmem:[#allocation2 + $0x2] sm:$0x3]
    %v183 = vld [vmem:[#allocation2 + $0x4] sm:$0x3]
    %v184 = vld [vmem:[#allocation2 + $0x6] sm:$0x3]
    %v185 = vld [vmem:[#allocation2 + $0x8] sm:$0x3]
    %v186 = vld [vmem:[#allocation2 + $0xa] sm:$0x3]
    %v187 = vld [vmem:[#allocation2 + $0xc] sm:$0x3]
    %v188 = vld [vmem:[#allocation2 + $0xe] sm:$0x3]
    %vm189 = vcmp.gt.f32.partialorder %v181, 0.5
    %vm190 = vcmp.gt.f32.partialorder %v182, 0.5
    %vm191 = vcmp.gt.f32.partialorder %v183, 0.5
    %vm192 = vcmp.gt.f32.partialorder %v184, 0.5
    %vm193 = vcmp.gt.f32.partialorder %v185, 0.5
    %vm194 = vcmp.gt.f32.partialorder %v186, 0.5
    %vm195 = vcmp.gt.f32.partialorder %v187, 0.5
    %vm196 = vcmp.gt.f32.partialorder %v188, 0.5
    %v201 = vunpack.c.l.b16 %v64
    %v202 = vunpack.c.l.b16 %v65
    %v203 = vunpack.c.l.b16 %v66
    %v204 = vunpack.c.l.b16 %v67
    %v205 = vpack.c.b16 %v202, %v201
    %v206 = vpack.c.b16 %v204, %v203
    %v210 = vsel %vm92, 0, 0
    %212 = vmatprep.subr.bf16.mxu0 0
    %213 = vmatpush1.bf16.msra.mxu0 0
    %214 = vmatprep.subr.bf16.mxu0 0
    %215 = vmatpush1.bf16.msra.mxu0 0
    %216 = vmatprep.subr.bf16.mxu0 0
    %217 = vmatpush1.bf16.msra.mxu0 0
    %218 = vmatprep.subr.bf16.mxu0 0
    %219 = vmatpush1.bf16.msra.mxu0 0
    %220 = vmatprep.subr.bf16.mxu0 0
    %221 = vmatpush1.bf16.msra.mxu0 0
    %222 = vmatprep.subr.bf16.mxu0 0
    %223 = vmatpush1.bf16.msra.mxu0 0
    %224 = vmatprep.subr.bf16.mxu0 0
    %225 = vmatpush1.bf16.msra.mxu0 %v206
    %226 = vmatprep.subr.bf16.mxu0 0
    %227 = vmatpush1.bf16.msra.mxu0 %v205
    %228 = vmatprep.subr.bf16.mxu0 0
    %229 = vmatpush2.bf16.msra.mxu0 0
    %230 = vmatprep.subr.bf16.mxu0 0
    %231 = vmatpush2.bf16.msra.mxu0 0
    %232 = vmatprep.subr.bf16.mxu0 0
    %233 = vmatpush2.bf16.msra.mxu0 0
    %234 = vmatprep.subr.bf16.mxu0 0
    %235 = vmatpush2.bf16.msra.mxu0 0
    %236 = vmatprep.subr.bf16.mxu0 0
    %237 = vmatpush2.bf16.msra.mxu0 0
    %238 = vmatprep.subr.bf16.mxu0 0
    %239 = vmatpush2.bf16.msra.mxu0 0
    %240 = vmatprep.subr.bf16.mxu0 0
    %241 = vmatpush2.bf16.msra.mxu0 0
    %242 = vmatprep.subr.bf16.mxu0 0
    %243 = vmatpush2.bf16.msra.mxu0 0
    %244 = vmatprep.mubr.bf16.mxu0 0
    %245 = vmatmul.mubr.bf16.gmra.mxu0 %v210
    %v246 = vpop.f32.mrf.mxu0
    %v247 = vadd.f32 0.0, %v246
    %v248 = vpop.f32.mrf.mxu0
    %v249 = vpop.f32.mrf.mxu0
    %v250 = vpop.f32.mrf.mxu0
    %251 = vdwg.mxu0
    %v252 = vadd.f32 %v146, %v247
    %v253 = vxor.u32 %v252, 2147483648
    %v254 = vmul.f32 %v253, 1.442695
    %v255 = vpow.pop %v254
    %v256 = vadd.f32 %v255, 1.0
    %v257 = vrcp.pop %v256
    %v258 = vmul.f32 1.0, %v257
    %v259 = vmul.f32 %v258, 2.0
    %v260 = vsub.f32 %v259, 1.0
    %v261 = vmul.f32 %v258, 0.0
    %263 = vrot.lane.b32.xlu0 %v260, 64
    %v264 = vpop.permute.xlu0 %263
    %v266 = vmul.f32 %v258, %v264
    %268 = vrot.lane.b32.xlu0 %v266, 32
    %v269 = vpop.permute.xlu0 %268
    %v271 = vadd.f32 %v261, %v269
    %v272 = vtanh.pop %v271
    %274 = vrot.lane.b32.xlu0 %v272, 64
    %v275 = vpop.permute.xlu0 %274
    %v277 = vmul.f32 %v258, %v275
    %v280 = vunpack.c.l.s4 1983009808
    %v281 = vunpack.c.0.s8 %v280
    %v282 = vlaneseq
    %v283 = vshrl.u32 %v282, 7
    %v284 = vsub.s32 %v281, %v283
    %v285 = vrot.slane %v271, %v284
    %286 = vrot.lane.b32.xlu0 %v285, 96
    %v287 = vpop.permute.xlu0 %286
    %v289 = vsel %vm189, %v287, 0.0
    %v292 = vunpack.c.l.s4 1983009808
    %v293 = vunpack.c.0.s8 %v292
    %v294 = vlaneseq
    %v295 = vshrl.u32 %v294, 7
    %v296 = vsub.s32 %v293, %v295
    %v297 = vrot.slane %v277, %v296
    %298 = vrot.lane.b32.xlu0 %v297, 32
    %v299 = vpop.permute.xlu0 %298
    %v301 = vsel %vm189, %v299, 0.0
    %v302 = vpack.c.bf16 %v301, %v301
    %v304 = vsel %vm92, %v302, 0
    %306 = vmatprep.subr.bf16.mxu0 0
    %307 = vmatpush1.bf16.msra.mxu0 0
    %308 = vmatprep.subr.bf16.mxu0 0
    %309 = vmatpush1.bf16.msra.mxu0 0
    %310 = vmatprep.subr.bf16.mxu0 0
    %311 = vmatpush1.bf16.msra.mxu0 0
    %312 = vmatprep.subr.bf16.mxu0 0
    %313 = vmatpush1.bf16.msra.mxu0 0
    %314 = vmatprep.subr.bf16.mxu0 0
    %315 = vmatpush1.bf16.msra.mxu0 0
    %316 = vmatprep.subr.bf16.mxu0 0
    %317 = vmatpush1.bf16.msra.mxu0 0
    %318 = vmatprep.subr.bf16.mxu0 0
    %319 = vmatpush1.bf16.msra.mxu0 %v206
    %320 = vmatprep.subr.bf16.mxu0 0
    %321 = vmatpush1.bf16.msra.mxu0 %v205
    %322 = vmatprep.subr.bf16.mxu0 0
    %323 = vmatpush2.bf16.msra.mxu0 0
    %324 = vmatprep.subr.bf16.mxu0 0
    %325 = vmatpush2.bf16.msra.mxu0 0
    %326 = vmatprep.subr.bf16.mxu0 0
    %327 = vmatpush2.bf16.msra.mxu0 0
    %328 = vmatprep.subr.bf16.mxu0 0
    %329 = vmatpush2.bf16.msra.mxu0 0
    %330 = vmatprep.subr.bf16.mxu0 0
    %331 = vmatpush2.bf16.msra.mxu0 0
    %332 = vmatprep.subr.bf16.mxu0 0
    %333 = vmatpush2.bf16.msra.mxu0 0
    %334 = vmatprep.subr.bf16.mxu0 0
    %335 = vmatpush2.bf16.msra.mxu0 0
    %336 = vmatprep.subr.bf16.mxu0 0
    %337 = vmatpush2.bf16.msra.mxu0 0
    %338 = vmatprep.mubr.bf16.mxu0 0
    %339 = vmatmul.mubr.bf16.gmra.mxu0 %v304
    %v340 = vpop.f32.mrf.mxu0
    %v341 = vadd.f32 0.0, %v340
    %v342 = vpop.f32.mrf.mxu0
    %v343 = vpop.f32.mrf.mxu0
    %v344 = vpop.f32.mrf.mxu0
    %345 = vdwg.mxu0
    %v346 = vadd.f32 %v154, %v341
    %v347 = vxor.u32 %v346, 2147483648
    %v348 = vmul.f32 %v347, 1.442695
    %v349 = vpow.pop %v348
    %v350 = vadd.f32 %v349, 1.0
    %v351 = vrcp.pop %v350
    %v352 = vmul.f32 1.0, %v351
    %v353 = vmul.f32 %v352, 2.0
    %v354 = vsub.f32 %v353, 1.0
    %v357 = vunpack.c.l.s4 1983009808
    %v358 = vunpack.c.0.s8 %v357
    %v359 = vlaneseq
    %v360 = vshrl.u32 %v359, 7
    %v361 = vsub.s32 %v358, %v360
    %v362 = vrot.slane %v289, %v361
    %363 = vrot.lane.b32.xlu0 %v362, 32
    %v364 = vpop.permute.xlu0 %363
    %v366 = vmul.f32 %v352, %v364
    %368 = vrot.lane.b32.xlu0 %v354, 64
    %v369 = vpop.permute.xlu0 %368
    %v371 = vmul.f32 %v352, %v369
    %373 = vrot.lane.b32.xlu0 %v371, 32
    %v374 = vpop.permute.xlu0 %373
    %v376 = vadd.f32 %v366, %v374
    %v377 = vtanh.pop %v376
    %379 = vrot.lane.b32.xlu0 %v377, 64
    %v380 = vpop.permute.xlu0 %379
    %v382 = vmul.f32 %v352, %v380
    %v385 = vunpack.c.l.s4 1983009808
    %v386 = vunpack.c.0.s8 %v385
    %v387 = vlaneseq
    %v388 = vshrl.u32 %v387, 7
    %v389 = vsub.s32 %v386, %v388
    %v390 = vrot.slane %v376, %v389
    %391 = vrot.lane.b32.xlu0 %v390, 96
    %v392 = vpop.permute.xlu0 %391
    %v394 = vsel %vm190, %v392, %v289
    %v397 = vunpack.c.l.s4 1983009808
    %v398 = vunpack.c.0.s8 %v397
    %v399 = vlaneseq
    %v400 = vshrl.u32 %v399, 7
    %v401 = vsub.s32 %v398, %v400
    %v402 = vrot.slane %v382, %v401
    %403 = vrot.lane.b32.xlu0 %v402, 32
    %v404 = vpop.permute.xlu0 %403
    %v406 = vsel %vm190, %v404, %v301
    %v407 = vpack.c.bf16 %v406, %v406
    %v409 = vsel %vm92, %v407, 0
    %411 = vmatprep.subr.bf16.mxu0 0
    %412 = vmatpush1.bf16.msra.mxu0 0
    %413 = vmatprep.subr.bf16.mxu0 0
    %414 = vmatpush1.bf16.msra.mxu0 0
    %415 = vmatprep.subr.bf16.mxu0 0
    %416 = vmatpush1.bf16.msra.mxu0 0
    %417 = vmatprep.subr.bf16.mxu0 0
    %418 = vmatpush1.bf16.msra.mxu0 0
    %419 = vmatprep.subr.bf16.mxu0 0
    %420 = vmatpush1.bf16.msra.mxu0 0
    %421 = vmatprep.subr.bf16.mxu0 0
    %422 = vmatpush1.bf16.msra.mxu0 0
    %423 = vmatprep.subr.bf16.mxu0 0
    %424 = vmatpush1.bf16.msra.mxu0 %v206
    %425 = vmatprep.subr.bf16.mxu0 0
    %426 = vmatpush1.bf16.msra.mxu0 %v205
    %427 = vmatprep.subr.bf16.mxu0 0
    %428 = vmatpush2.bf16.msra.mxu0 0
    %429 = vmatprep.subr.bf16.mxu0 0
    %430 = vmatpush2.bf16.msra.mxu0 0
    %431 = vmatprep.subr.bf16.mxu0 0
    %432 = vmatpush2.bf16.msra.mxu0 0
    %433 = vmatprep.subr.bf16.mxu0 0
    %434 = vmatpush2.bf16.msra.mxu0 0
    %435 = vmatprep.subr.bf16.mxu0 0
    %436 = vmatpush2.bf16.msra.mxu0 0
    %437 = vmatprep.subr.bf16.mxu0 0
    %438 = vmatpush2.bf16.msra.mxu0 0
    %439 = vmatprep.subr.bf16.mxu0 0
    %440 = vmatpush2.bf16.msra.mxu0 0
    %441 = vmatprep.subr.bf16.mxu0 0
    %442 = vmatpush2.bf16.msra.mxu0 0
    %443 = vmatprep.mubr.bf16.mxu0 0
    %444 = vmatmul.mubr.bf16.gmra.mxu0 %v409
    %v445 = vpop.f32.mrf.mxu0
    %v446 = vadd.f32 0.0, %v445
    %v447 = vpop.f32.mrf.mxu0
    %v448 = vpop.f32.mrf.mxu0
    %v449 = vpop.f32.mrf.mxu0
    %450 = vdwg.mxu0
    %v451 = vadd.f32 %v153, %v446
    %v452 = vxor.u32 %v451, 2147483648
    %v453 = vmul.f32 %v452, 1.442695
    %v454 = vpow.pop %v453
    %v455 = vadd.f32 %v454, 1.0
    %v456 = vrcp.pop %v455
    %v457 = vmul.f32 1.0, %v456
    %v458 = vmul.f32 %v457, 2.0
    %v459 = vsub.f32 %v458, 1.0
    %v462 = vunpack.c.l.s4 1983009808
    %v463 = vunpack.c.0.s8 %v462
    %v464 = vlaneseq
    %v465 = vshrl.u32 %v464, 7
    %v466 = vsub.s32 %v463, %v465
    %v467 = vrot.slane %v394, %v466
    %468 = vrot.lane.b32.xlu0 %v467, 32
    %v469 = vpop.permute.xlu0 %468
    %v471 = vmul.f32 %v457, %v469
    %473 = vrot.lane.b32.xlu0 %v459, 64
    %v474 = vpop.permute.xlu0 %473
    %v476 = vmul.f32 %v457, %v474
    %478 = vrot.lane.b32.xlu0 %v476, 32
    %v479 = vpop.permute.xlu0 %478
    %v481 = vadd.f32 %v471, %v479
    %v482 = vtanh.pop %v481
    %484 = vrot.lane.b32.xlu0 %v482, 64
    %v485 = vpop.permute.xlu0 %484
    %v487 = vmul.f32 %v457, %v485
    %v490 = vunpack.c.l.s4 1983009808
    %v491 = vunpack.c.0.s8 %v490
    %v492 = vlaneseq
    %v493 = vshrl.u32 %v492, 7
    %v494 = vsub.s32 %v491, %v493
    %v495 = vrot.slane %v481, %v494
    %496 = vrot.lane.b32.xlu0 %v495, 96
    %v497 = vpop.permute.xlu0 %496
    %v499 = vsel %vm191, %v497, %v394
    %v502 = vunpack.c.l.s4 1983009808
    %v503 = vunpack.c.0.s8 %v502
    %v504 = vlaneseq
    %v505 = vshrl.u32 %v504, 7
    %v506 = vsub.s32 %v503, %v505
    %v507 = vrot.slane %v487, %v506
    %508 = vrot.lane.b32.xlu0 %v507, 32
    %v509 = vpop.permute.xlu0 %508
    %v511 = vsel %vm191, %v509, %v406
    %v512 = vpack.c.bf16 %v511, %v511
    %v514 = vsel %vm92, %v512, 0
    %516 = vmatprep.subr.bf16.mxu0 0
    %517 = vmatpush1.bf16.msra.mxu0 0
    %518 = vmatprep.subr.bf16.mxu0 0
    %519 = vmatpush1.bf16.msra.mxu0 0
    %520 = vmatprep.subr.bf16.mxu0 0
    %521 = vmatpush1.bf16.msra.mxu0 0
    %522 = vmatprep.subr.bf16.mxu0 0
    %523 = vmatpush1.bf16.msra.mxu0 0
    %524 = vmatprep.subr.bf16.mxu0 0
    %525 = vmatpush1.bf16.msra.mxu0 0
    %526 = vmatprep.subr.bf16.mxu0 0
    %527 = vmatpush1.bf16.msra.mxu0 0
    %528 = vmatprep.subr.bf16.mxu0 0
    %529 = vmatpush1.bf16.msra.mxu0 %v206
    %530 = vmatprep.subr.bf16.mxu0 0
    %531 = vmatpush1.bf16.msra.mxu0 %v205
    %532 = vmatprep.subr.bf16.mxu0 0
    %533 = vmatpush2.bf16.msra.mxu0 0
    %534 = vmatprep.subr.bf16.mxu0 0
    %535 = vmatpush2.bf16.msra.mxu0 0
    %536 = vmatprep.subr.bf16.mxu0 0
    %537 = vmatpush2.bf16.msra.mxu0 0
    %538 = vmatprep.subr.bf16.mxu0 0
    %539 = vmatpush2.bf16.msra.mxu0 0
    %540 = vmatprep.subr.bf16.mxu0 0
    %541 = vmatpush2.bf16.msra.mxu0 0
    %542 = vmatprep.subr.bf16.mxu0 0
    %543 = vmatpush2.bf16.msra.mxu0 0
    %544 = vmatprep.subr.bf16.mxu0 0
    %545 = vmatpush2.bf16.msra.mxu0 0
    %546 = vmatprep.subr.bf16.mxu0 0
    %547 = vmatpush2.bf16.msra.mxu0 0
    %548 = vmatprep.mubr.bf16.mxu0 0
    %549 = vmatmul.mubr.bf16.gmra.mxu0 %v514
    %v550 = vpop.f32.mrf.mxu0
    %v551 = vadd.f32 0.0, %v550
    %v552 = vpop.f32.mrf.mxu0
    %v553 = vpop.f32.mrf.mxu0
    %v554 = vpop.f32.mrf.mxu0
    %555 = vdwg.mxu0
    %v556 = vadd.f32 %v155, %v551
    %v557 = vxor.u32 %v556, 2147483648
    %v558 = vmul.f32 %v557, 1.442695
    %v559 = vpow.pop %v558
    %v560 = vadd.f32 %v559, 1.0
    %v561 = vrcp.pop %v560
    %v562 = vmul.f32 1.0, %v561
    %v563 = vmul.f32 %v562, 2.0
    %v564 = vsub.f32 %v563, 1.0
    %v567 = vunpack.c.l.s4 1983009808
    %v568 = vunpack.c.0.s8 %v567
    %v569 = vlaneseq
    %v570 = vshrl.u32 %v569, 7
    %v571 = vsub.s32 %v568, %v570
    %v572 = vrot.slane %v499, %v571
    %573 = vrot.lane.b32.xlu0 %v572, 32
    %v574 = vpop.permute.xlu0 %573
    %v576 = vmul.f32 %v562, %v574
    %578 = vrot.lane.b32.xlu0 %v564, 64
    %v579 = vpop.permute.xlu0 %578
    %v581 = vmul.f32 %v562, %v579
    %583 = vrot.lane.b32.xlu0 %v581, 32
    %v584 = vpop.permute.xlu0 %583
    %v586 = vadd.f32 %v576, %v584
    %v587 = vtanh.pop %v586
    %589 = vrot.lane.b32.xlu0 %v587, 64
    %v590 = vpop.permute.xlu0 %589
    %v592 = vmul.f32 %v562, %v590
    %v595 = vunpack.c.l.s4 1983009808
    %v596 = vunpack.c.0.s8 %v595
    %v597 = vlaneseq
    %v598 = vshrl.u32 %v597, 7
    %v599 = vsub.s32 %v596, %v598
    %v600 = vrot.slane %v586, %v599
    %601 = vrot.lane.b32.xlu0 %v600, 96
    %v602 = vpop.permute.xlu0 %601
    %v604 = vsel %vm192, %v602, %v499
    %v607 = vunpack.c.l.s4 1983009808
    %v608 = vunpack.c.0.s8 %v607
    %v609 = vlaneseq
    %v610 = vshrl.u32 %v609, 7
    %v611 = vsub.s32 %v608, %v610
    %v612 = vrot.slane %v592, %v611
    %613 = vrot.lane.b32.xlu0 %v612, 32
    %v614 = vpop.permute.xlu0 %613
    %v616 = vsel %vm192, %v614, %v511
    %v617 = vpack.c.bf16 %v616, %v616
    %v619 = vsel %vm92, %v617, 0
    %621 = vmatprep.subr.bf16.mxu0 0
    %622 = vmatpush1.bf16.msra.mxu0 0
    %623 = vmatprep.subr.bf16.mxu0 0
    %624 = vmatpush1.bf16.msra.mxu0 0
    %625 = vmatprep.subr.bf16.mxu0 0
    %626 = vmatpush1.bf16.msra.mxu0 0
    %627 = vmatprep.subr.bf16.mxu0 0
    %628 = vmatpush1.bf16.msra.mxu0 0
    %629 = vmatprep.subr.bf16.mxu0 0
    %630 = vmatpush1.bf16.msra.mxu0 0
    %631 = vmatprep.subr.bf16.mxu0 0
    %632 = vmatpush1.bf16.msra.mxu0 0
    %633 = vmatprep.subr.bf16.mxu0 0
    %634 = vmatpush1.bf16.msra.mxu0 %v206
    %635 = vmatprep.subr.bf16.mxu0 0
    %636 = vmatpush1.bf16.msra.mxu0 %v205
    %637 = vmatprep.subr.bf16.mxu0 0
    %638 = vmatpush2.bf16.msra.mxu0 0
    %639 = vmatprep.subr.bf16.mxu0 0
    %640 = vmatpush2.bf16.msra.mxu0 0
    %641 = vmatprep.subr.bf16.mxu0 0
    %642 = vmatpush2.bf16.msra.mxu0 0
    %643 = vmatprep.subr.bf16.mxu0 0
    %644 = vmatpush2.bf16.msra.mxu0 0
    %645 = vmatprep.subr.bf16.mxu0 0
    %646 = vmatpush2.bf16.msra.mxu0 0
    %647 = vmatprep.subr.bf16.mxu0 0
    %648 = vmatpush2.bf16.msra.mxu0 0
    %649 = vmatprep.subr.bf16.mxu0 0
    %650 = vmatpush2.bf16.msra.mxu0 0
    %651 = vmatprep.subr.bf16.mxu0 0
    %652 = vmatpush2.bf16.msra.mxu0 0
    %653 = vmatprep.mubr.bf16.mxu0 0
    %654 = vmatmul.mubr.bf16.gmra.mxu0 %v619
    %v655 = vpop.f32.mrf.mxu0
    %v656 = vadd.f32 0.0, %v655
    %v657 = vpop.f32.mrf.mxu0
    %v658 = vpop.f32.mrf.mxu0
    %v659 = vpop.f32.mrf.mxu0
    %660 = vdwg.mxu0
    %v661 = vadd.f32 %v163, %v656
    %v662 = vxor.u32 %v661, 2147483648
    %v663 = vmul.f32 %v662, 1.442695
    %v664 = vpow.pop %v663
    %v665 = vadd.f32 %v664, 1.0
    %v666 = vrcp.pop %v665
    %v667 = vmul.f32 1.0, %v666
    %v668 = vmul.f32 %v667, 2.0
    %v669 = vsub.f32 %v668, 1.0
    %v672 = vunpack.c.l.s4 1983009808
    %v673 = vunpack.c.0.s8 %v672
    %v674 = vlaneseq
    %v675 = vshrl.u32 %v674, 7
    %v676 = vsub.s32 %v673, %v675
    %v677 = vrot.slane %v604, %v676
    %678 = vrot.lane.b32.xlu0 %v677, 32
    %v679 = vpop.permute.xlu0 %678
    %v681 = vmul.f32 %v667, %v679
    %683 = vrot.lane.b32.xlu0 %v669, 64
    %v684 = vpop.permute.xlu0 %683
    %v686 = vmul.f32 %v667, %v684
    %688 = vrot.lane.b32.xlu0 %v686, 32
    %v689 = vpop.permute.xlu0 %688
    %v691 = vadd.f32 %v681, %v689
    %v692 = vtanh.pop %v691
    %694 = vrot.lane.b32.xlu0 %v692, 64
    %v695 = vpop.permute.xlu0 %694
    %v697 = vmul.f32 %v667, %v695
    %v700 = vunpack.c.l.s4 1983009808
    %v701 = vunpack.c.0.s8 %v700
    %v702 = vlaneseq
    %v703 = vshrl.u32 %v702, 7
    %v704 = vsub.s32 %v701, %v703
    %v705 = vrot.slane %v691, %v704
    %706 = vrot.lane.b32.xlu0 %v705, 96
    %v707 = vpop.permute.xlu0 %706
    %v709 = vsel %vm193, %v707, %v604
    %v712 = vunpack.c.l.s4 1983009808
    %v713 = vunpack.c.0.s8 %v712
    %v714 = vlaneseq
    %v715 = vshrl.u32 %v714, 7
    %v716 = vsub.s32 %v713, %v715
    %v717 = vrot.slane %v697, %v716
    %718 = vrot.lane.b32.xlu0 %v717, 32
    %v719 = vpop.permute.xlu0 %718
    %v721 = vsel %vm193, %v719, %v616
    %v722 = vpack.c.bf16 %v721, %v721
    %v724 = vsel %vm92, %v722, 0
    %726 = vmatprep.subr.bf16.mxu0 0
    %727 = vmatpush1.bf16.msra.mxu0 0
    %728 = vmatprep.subr.bf16.mxu0 0
    %729 = vmatpush1.bf16.msra.mxu0 0
    %730 = vmatprep.subr.bf16.mxu0 0
    %731 = vmatpush1.bf16.msra.mxu0 0
    %732 = vmatprep.subr.bf16.mxu0 0
    %733 = vmatpush1.bf16.msra.mxu0 0
    %734 = vmatprep.subr.bf16.mxu0 0
    %735 = vmatpush1.bf16.msra.mxu0 0
    %736 = vmatprep.subr.bf16.mxu0 0
    %737 = vmatpush1.bf16.msra.mxu0 0
    %738 = vmatprep.subr.bf16.mxu0 0
    %739 = vmatpush1.bf16.msra.mxu0 %v206
    %740 = vmatprep.subr.bf16.mxu0 0
    %741 = vmatpush1.bf16.msra.mxu0 %v205
    %742 = vmatprep.subr.bf16.mxu0 0
    %743 = vmatpush2.bf16.msra.mxu0 0
    %744 = vmatprep.subr.bf16.mxu0 0
    %745 = vmatpush2.bf16.msra.mxu0 0
    %746 = vmatprep.subr.bf16.mxu0 0
    %747 = vmatpush2.bf16.msra.mxu0 0
    %748 = vmatprep.subr.bf16.mxu0 0
    %749 = vmatpush2.bf16.msra.mxu0 0
    %750 = vmatprep.subr.bf16.mxu0 0
    %751 = vmatpush2.bf16.msra.mxu0 0
    %752 = vmatprep.subr.bf16.mxu0 0
    %753 = vmatpush2.bf16.msra.mxu0 0
    %754 = vmatprep.subr.bf16.mxu0 0
    %755 = vmatpush2.bf16.msra.mxu0 0
    %756 = vmatprep.subr.bf16.mxu0 0
    %757 = vmatpush2.bf16.msra.mxu0 0
    %758 = vmatprep.mubr.bf16.mxu0 0
    %759 = vmatmul.mubr.bf16.gmra.mxu0 %v724
    %v760 = vpop.f32.mrf.mxu0
    %v761 = vadd.f32 0.0, %v760
    %v762 = vpop.f32.mrf.mxu0
    %v763 = vpop.f32.mrf.mxu0
    %v764 = vpop.f32.mrf.mxu0
    %765 = vdwg.mxu0
    %v766 = vadd.f32 %v171, %v761
    %v767 = vxor.u32 %v766, 2147483648
    %v768 = vmul.f32 %v767, 1.442695
    %v769 = vpow.pop %v768
    %v770 = vadd.f32 %v769, 1.0
    %v771 = vrcp.pop %v770
    %v772 = vmul.f32 1.0, %v771
    %v773 = vmul.f32 %v772, 2.0
    %v774 = vsub.f32 %v773, 1.0
    %v777 = vunpack.c.l.s4 1983009808
    %v778 = vunpack.c.0.s8 %v777
    %v779 = vlaneseq
    %v780 = vshrl.u32 %v779, 7
    %v781 = vsub.s32 %v778, %v780
    %v782 = vrot.slane %v709, %v781
    %783 = vrot.lane.b32.xlu0 %v782, 32
    %v784 = vpop.permute.xlu0 %783
    %v786 = vmul.f32 %v772, %v784
    %788 = vrot.lane.b32.xlu0 %v774, 64
    %v789 = vpop.permute.xlu0 %788
    %v791 = vmul.f32 %v772, %v789
    %793 = vrot.lane.b32.xlu0 %v791, 32
    %v794 = vpop.permute.xlu0 %793
    %v796 = vadd.f32 %v786, %v794
    %v797 = vtanh.pop %v796
    %799 = vrot.lane.b32.xlu0 %v797, 64
    %v800 = vpop.permute.xlu0 %799
    %v802 = vmul.f32 %v772, %v800
    %v805 = vunpack.c.l.s4 1983009808
    %v806 = vunpack.c.0.s8 %v805
    %v807 = vlaneseq
    %v808 = vshrl.u32 %v807, 7
    %v809 = vsub.s32 %v806, %v808
    %v810 = vrot.slane %v796, %v809
    %811 = vrot.lane.b32.xlu0 %v810, 96
    %v812 = vpop.permute.xlu0 %811
    %v814 = vsel %vm194, %v812, %v709
    %v817 = vunpack.c.l.s4 1983009808
    %v818 = vunpack.c.0.s8 %v817
    %v819 = vlaneseq
    %v820 = vshrl.u32 %v819, 7
    %v821 = vsub.s32 %v818, %v820
    %v822 = vrot.slane %v802, %v821
    %823 = vrot.lane.b32.xlu0 %v822, 32
    %v824 = vpop.permute.xlu0 %823
    %v826 = vsel %vm194, %v824, %v721
    %v827 = vpack.c.bf16 %v826, %v826
    %v829 = vsel %vm92, %v827, 0
    %831 = vmatprep.subr.bf16.mxu0 0
    %832 = vmatpush1.bf16.msra.mxu0 0
    %833 = vmatprep.subr.bf16.mxu0 0
    %834 = vmatpush1.bf16.msra.mxu0 0
    %835 = vmatprep.subr.bf16.mxu0 0
    %836 = vmatpush1.bf16.msra.mxu0 0
    %837 = vmatprep.subr.bf16.mxu0 0
    %838 = vmatpush1.bf16.msra.mxu0 0
    %839 = vmatprep.subr.bf16.mxu0 0
    %840 = vmatpush1.bf16.msra.mxu0 0
    %841 = vmatprep.subr.bf16.mxu0 0
    %842 = vmatpush1.bf16.msra.mxu0 0
    %843 = vmatprep.subr.bf16.mxu0 0
    %844 = vmatpush1.bf16.msra.mxu0 %v206
    %845 = vmatprep.subr.bf16.mxu0 0
    %846 = vmatpush1.bf16.msra.mxu0 %v205
    %847 = vmatprep.subr.bf16.mxu0 0
    %848 = vmatpush2.bf16.msra.mxu0 0
    %849 = vmatprep.subr.bf16.mxu0 0
    %850 = vmatpush2.bf16.msra.mxu0 0
    %851 = vmatprep.subr.bf16.mxu0 0
    %852 = vmatpush2.bf16.msra.mxu0 0
    %853 = vmatprep.subr.bf16.mxu0 0
    %854 = vmatpush2.bf16.msra.mxu0 0
    %855 = vmatprep.subr.bf16.mxu0 0
    %856 = vmatpush2.bf16.msra.mxu0 0
    %857 = vmatprep.subr.bf16.mxu0 0
    %858 = vmatpush2.bf16.msra.mxu0 0
    %859 = vmatprep.subr.bf16.mxu0 0
    %860 = vmatpush2.bf16.msra.mxu0 0
    %861 = vmatprep.subr.bf16.mxu0 0
    %862 = vmatpush2.bf16.msra.mxu0 0
    %863 = vmatprep.mubr.bf16.mxu0 0
    %864 = vmatmul.mubr.bf16.gmra.mxu0 %v829
    %v865 = vpop.f32.mrf.mxu0
    %v866 = vadd.f32 0.0, %v865
    %v867 = vpop.f32.mrf.mxu0
    %v868 = vpop.f32.mrf.mxu0
    %v869 = vpop.f32.mrf.mxu0
    %870 = vdwg.mxu0
    %v871 = vadd.f32 %v170, %v866
    %v872 = vxor.u32 %v871, 2147483648
    %v873 = vmul.f32 %v872, 1.442695
    %v874 = vpow.pop %v873
    %v875 = vadd.f32 %v874, 1.0
    %v876 = vrcp.pop %v875
    %v877 = vmul.f32 1.0, %v876
    %v878 = vmul.f32 %v877, 2.0
    %v879 = vsub.f32 %v878, 1.0
    %v882 = vunpack.c.l.s4 1983009808
    %v883 = vunpack.c.0.s8 %v882
    %v884 = vlaneseq
    %v885 = vshrl.u32 %v884, 7
    %v886 = vsub.s32 %v883, %v885
    %v887 = vrot.slane %v814, %v886
    %888 = vrot.lane.b32.xlu0 %v887, 32
    %v889 = vpop.permute.xlu0 %888
    %v891 = vmul.f32 %v877, %v889
    %893 = vrot.lane.b32.xlu0 %v879, 64
    %v894 = vpop.permute.xlu0 %893
    %v896 = vmul.f32 %v877, %v894
    %898 = vrot.lane.b32.xlu0 %v896, 32
    %v899 = vpop.permute.xlu0 %898
    %v901 = vadd.f32 %v891, %v899
    %v902 = vtanh.pop %v901
    %904 = vrot.lane.b32.xlu0 %v902, 64
    %v905 = vpop.permute.xlu0 %904
    %v907 = vmul.f32 %v877, %v905
    %v910 = vunpack.c.l.s4 1983009808
    %v911 = vunpack.c.0.s8 %v910
    %v912 = vlaneseq
    %v913 = vshrl.u32 %v912, 7
    %v914 = vsub.s32 %v911, %v913
    %v915 = vrot.slane %v901, %v914
    %916 = vrot.lane.b32.xlu0 %v915, 96
    %v917 = vpop.permute.xlu0 %916
    %v919 = vsel %vm195, %v917, %v814
    %v922 = vunpack.c.l.s4 1983009808
    %v923 = vunpack.c.0.s8 %v922
    %v924 = vlaneseq
    %v925 = vshrl.u32 %v924, 7
    %v926 = vsub.s32 %v923, %v925
    %v927 = vrot.slane %v907, %v926
    %928 = vrot.lane.b32.xlu0 %v927, 32
    %v929 = vpop.permute.xlu0 %928
    %v931 = vsel %vm195, %v929, %v826
    %v932 = vpack.c.bf16 %v931, %v931
    %v934 = vsel %vm92, %v932, 0
    %936 = vmatprep.subr.bf16.mxu0 0
    %937 = vmatpush1.bf16.msra.mxu0 0
    %938 = vmatprep.subr.bf16.mxu0 0
    %939 = vmatpush1.bf16.msra.mxu0 0
    %940 = vmatprep.subr.bf16.mxu0 0
    %941 = vmatpush1.bf16.msra.mxu0 0
    %942 = vmatprep.subr.bf16.mxu0 0
    %943 = vmatpush1.bf16.msra.mxu0 0
    %944 = vmatprep.subr.bf16.mxu0 0
    %945 = vmatpush1.bf16.msra.mxu0 0
    %946 = vmatprep.subr.bf16.mxu0 0
    %947 = vmatpush1.bf16.msra.mxu0 0
    %948 = vmatprep.subr.bf16.mxu0 0
    %949 = vmatpush1.bf16.msra.mxu0 %v206
    %950 = vmatprep.subr.bf16.mxu0 0
    %951 = vmatpush1.bf16.msra.mxu0 %v205
    %952 = vmatprep.subr.bf16.mxu0 0
    %953 = vmatpush2.bf16.msra.mxu0 0
    %954 = vmatprep.subr.bf16.mxu0 0
    %955 = vmatpush2.bf16.msra.mxu0 0
    %956 = vmatprep.subr.bf16.mxu0 0
    %957 = vmatpush2.bf16.msra.mxu0 0
    %958 = vmatprep.subr.bf16.mxu0 0
    %959 = vmatpush2.bf16.msra.mxu0 0
    %960 = vmatprep.subr.bf16.mxu0 0
    %961 = vmatpush2.bf16.msra.mxu0 0
    %962 = vmatprep.subr.bf16.mxu0 0
    %963 = vmatpush2.bf16.msra.mxu0 0
    %964 = vmatprep.subr.bf16.mxu0 0
    %965 = vmatpush2.bf16.msra.mxu0 0
    %966 = vmatprep.subr.bf16.mxu0 0
    %967 = vmatpush2.bf16.msra.mxu0 0
    %968 = vmatprep.mubr.bf16.mxu0 0
    %969 = vmatmul.mubr.bf16.gmra.mxu0 %v934
    %v970 = vpop.f32.mrf.mxu0
    %v971 = vadd.f32 0.0, %v970
    %v972 = vpop.f32.mrf.mxu0
    %v973 = vpop.f32.mrf.mxu0
    %v974 = vpop.f32.mrf.mxu0
    %975 = vdwg.mxu0
    %v976 = vadd.f32 %v172, %v971
    %v977 = vxor.u32 %v976, 2147483648
    %v978 = vmul.f32 %v977, 1.442695
    %v979 = vpow.pop %v978
    %v980 = vadd.f32 %v979, 1.0
    %v981 = vrcp.pop %v980
    %v982 = vmul.f32 1.0, %v981
    %v983 = vmul.f32 %v982, 2.0
    %v984 = vsub.f32 %v983, 1.0
    %v987 = vunpack.c.l.s4 1983009808
    %v988 = vunpack.c.0.s8 %v987
    %v989 = vlaneseq
    %v990 = vshrl.u32 %v989, 7
    %v991 = vsub.s32 %v988, %v990
    %v992 = vrot.slane %v919, %v991
    %993 = vrot.lane.b32.xlu0 %v992, 32
    %v994 = vpop.permute.xlu0 %993
    %v996 = vmul.f32 %v982, %v994
    %998 = vrot.lane.b32.xlu0 %v984, 64
    %v999 = vpop.permute.xlu0 %998
    %v1001 = vmul.f32 %v982, %v999
    %1003 = vrot.lane.b32.xlu0 %v1001, 32
    %v1004 = vpop.permute.xlu0 %1003
    %v1006 = vadd.f32 %v996, %v1004
    %v1007 = vtanh.pop %v1006
    %1009 = vrot.lane.b32.xlu0 %v1007, 64
    %v1010 = vpop.permute.xlu0 %1009
    %v1012 = vmul.f32 %v982, %v1010
    %v1015 = vunpack.c.l.s4 1983009808
    %v1016 = vunpack.c.0.s8 %v1015
    %v1017 = vlaneseq
    %v1018 = vshrl.u32 %v1017, 7
    %v1019 = vsub.s32 %v1016, %v1018
    %v1020 = vrot.slane %v1012, %v1019
    %1021 = vrot.lane.b32.xlu0 %v1020, 32
    %v1022 = vpop.permute.xlu0 %1021
    %v1024 = vsel %vm196, %v1022, %v931
    %v1025 = vld [vmem:[#allocation5 + $0x8] sm:$0x1]
    %v1026 = vld [vmem:[#allocation7 + $0x20] sm:$0xf]
    %v1027 = vld [vmem:[#allocation7 + $0x24] sm:$0xf]
    %v1028 = vld [vmem:[#allocation7 + $0x28] sm:$0xf]
    %v1029 = vld [vmem:[#allocation7 + $0x2c] sm:$0xf]
    %v1030 = vld [vmem:[%s3 + $0x1] sm:$0x1]
    %v1031 = vlaneseq
    %v1032 = vshrl.u32 %v1031, 7
    %v1033 = vsub.s32 0, %v1032
    %v1034 = vrot.slane %v1030, %v1033
    %v1039 = vunpack.c.l.b16 %v1026
    %v1040 = vunpack.c.l.b16 %v1027
    %v1041 = vunpack.c.l.b16 %v1028
    %v1042 = vunpack.c.l.b16 %v1029
    %v1043 = vpack.c.b16 %v1040, %v1039
    %v1044 = vpack.c.b16 %v1042, %v1041
    %v1048 = vsel %vm92, %v1025, 0
    %1050 = vmatprep.subr.bf16.mxu0 0
    %1051 = vmatpush1.bf16.msra.mxu0 0
    %1052 = vmatprep.subr.bf16.mxu0 0
    %1053 = vmatpush1.bf16.msra.mxu0 0
    %1054 = vmatprep.subr.bf16.mxu0 0
    %1055 = vmatpush1.bf16.msra.mxu0 0
    %1056 = vmatprep.subr.bf16.mxu0 0
    %1057 = vmatpush1.bf16.msra.mxu0 0
    %1058 = vmatprep.subr.bf16.mxu0 0
    %1059 = vmatpush1.bf16.msra.mxu0 0
    %1060 = vmatprep.subr.bf16.mxu0 0
    %1061 = vmatpush1.bf16.msra.mxu0 0
    %1062 = vmatprep.subr.bf16.mxu0 0
    %1063 = vmatpush1.bf16.msra.mxu0 %v1044
    %1064 = vmatprep.subr.bf16.mxu0 0
    %1065 = vmatpush1.bf16.msra.mxu0 %v1043
    %1066 = vmatprep.subr.bf16.mxu0 0
    %1067 = vmatpush2.bf16.msra.mxu0 0
    %1068 = vmatprep.subr.bf16.mxu0 0
    %1069 = vmatpush2.bf16.msra.mxu0 0
    %1070 = vmatprep.subr.bf16.mxu0 0
    %1071 = vmatpush2.bf16.msra.mxu0 0
    %1072 = vmatprep.subr.bf16.mxu0 0
    %1073 = vmatpush2.bf16.msra.mxu0 0
    %1074 = vmatprep.subr.bf16.mxu0 0
    %1075 = vmatpush2.bf16.msra.mxu0 0
    %1076 = vmatprep.subr.bf16.mxu0 0
    %1077 = vmatpush2.bf16.msra.mxu0 0
    %1078 = vmatprep.subr.bf16.mxu0 0
    %1079 = vmatpush2.bf16.msra.mxu0 0
    %1080 = vmatprep.subr.bf16.mxu0 0
    %1081 = vmatpush2.bf16.msra.mxu0 0
    %1082 = vmatprep.mubr.bf16.mxu0 0
    %1083 = vmatmul.mubr.bf16.gmra.mxu0 %v1048
    %v1084 = vpop.f32.mrf.mxu0
    %v1085 = vadd.f32 %v1034, %v1084
    %v1086 = vpop.f32.mrf.mxu0
    %v1087 = vpop.f32.mrf.mxu0
    %v1088 = vpop.f32.mrf.mxu0
    %1089 = vdwg.mxu0
    %v1090 = vmax.f32 %v1085, 0.0
    %v1091 = vpack.c.bf16 %v1024, %v1024
    %v1092 = vld [vmem:[#allocation7 + $0x30] sm:$0xf]
    %v1093 = vld [vmem:[#allocation7 + $0x34] sm:$0xf]
    %v1094 = vld [vmem:[#allocation7 + $0x38] sm:$0xf]
    %v1095 = vld [vmem:[#allocation7 + $0x3c] sm:$0xf]
    %v1096 = vpack.c.bf16 %v1090, %v1090
    %v1097 = vld [vmem:[#allocation7 + $0x40] sm:$0xf]
    %v1098 = vld [vmem:[#allocation7 + $0x44] sm:$0xf]
    %v1099 = vld [vmem:[#allocation7 + $0x48] sm:$0xf]
    %v1100 = vld [vmem:[#allocation7 + $0x4c] sm:$0xf]
    %v1105 = vunpack.c.l.b16 %v1097
    %v1106 = vunpack.c.l.b16 %v1098
    %v1107 = vunpack.c.l.b16 %v1099
    %v1108 = vunpack.c.l.b16 %v1100
    %v1109 = vpack.c.b16 %v1106, %v1105
    %v1110 = vpack.c.b16 %v1108, %v1107
    %v1114 = vsel %vm92, %v1096, 0
    %1116 = vmatprep.subr.bf16.mxu0 0
    %1117 = vmatpush1.bf16.msra.mxu0 0
    %1118 = vmatprep.subr.bf16.mxu0 0
    %1119 = vmatpush1.bf16.msra.mxu0 0
    %1120 = vmatprep.subr.bf16.mxu0 0
    %1121 = vmatpush1.bf16.msra.mxu0 0
    %1122 = vmatprep.subr.bf16.mxu0 0
    %1123 = vmatpush1.bf16.msra.mxu0 0
    %1124 = vmatprep.subr.bf16.mxu0 0
    %1125 = vmatpush1.bf16.msra.mxu0 0
    %1126 = vmatprep.subr.bf16.mxu0 0
    %1127 = vmatpush1.bf16.msra.mxu0 0
    %1128 = vmatprep.subr.bf16.mxu0 0
    %1129 = vmatpush1.bf16.msra.mxu0 %v1110
    %1130 = vmatprep.subr.bf16.mxu0 0
    %1131 = vmatpush1.bf16.msra.mxu0 %v1109
    %1132 = vmatprep.subr.bf16.mxu0 0
    %1133 = vmatpush2.bf16.msra.mxu0 0
    %1134 = vmatprep.subr.bf16.mxu0 0
    %1135 = vmatpush2.bf16.msra.mxu0 0
    %1136 = vmatprep.subr.bf16.mxu0 0
    %1137 = vmatpush2.bf16.msra.mxu0 0
    %1138 = vmatprep.subr.bf16.mxu0 0
    %1139 = vmatpush2.bf16.msra.mxu0 0
    %1140 = vmatprep.subr.bf16.mxu0 0
    %1141 = vmatpush2.bf16.msra.mxu0 0
    %1142 = vmatprep.subr.bf16.mxu0 0
    %1143 = vmatpush2.bf16.msra.mxu0 0
    %1144 = vmatprep.subr.bf16.mxu0 0
    %1145 = vmatpush2.bf16.msra.mxu0 0
    %1146 = vmatprep.subr.bf16.mxu0 0
    %1147 = vmatpush2.bf16.msra.mxu0 0
    %1148 = vmatprep.mubr.bf16.mxu0 0
    %1149 = vmatmul.mubr.bf16.gmra.mxu0 %v1114
    %v1150 = vpop.f32.mrf.mxu0
    %v1151 = vadd.f32 0.0, %v1150
    %v1152 = vpop.f32.mrf.mxu0
    %v1153 = vpop.f32.mrf.mxu0
    %v1154 = vpop.f32.mrf.mxu0
    %1155 = vdwg.mxu0
    %v1160 = vunpack.c.l.b16 %v1092
    %v1161 = vunpack.c.l.b16 %v1093
    %v1162 = vunpack.c.l.b16 %v1094
    %v1163 = vunpack.c.l.b16 %v1095
    %v1164 = vpack.c.b16 %v1161, %v1160
    %v1165 = vpack.c.b16 %v1163, %v1162
    %v1169 = vsel %vm92, %v1091, 0
    %1171 = vmatprep.subr.bf16.mxu0 0
    %1172 = vmatpush1.bf16.msra.mxu0 0
    %1173 = vmatprep.subr.bf16.mxu0 0
    %1174 = vmatpush1.bf16.msra.mxu0 0
    %1175 = vmatprep.subr.bf16.mxu0 0
    %1176 = vmatpush1.bf16.msra.mxu0 0
    %1177 = vmatprep.subr.bf16.mxu0 0
    %1178 = vmatpush1.bf16.msra.mxu0 0
    %1179 = vmatprep.subr.bf16.mxu0 0
    %1180 = vmatpush1.bf16.msra.mxu0 0
    %1181 = vmatprep.subr.bf16.mxu0 0
    %1182 = vmatpush1.bf16.msra.mxu0 0
    %1183 = vmatprep.subr.bf16.mxu0 0
    %1184 = vmatpush1.bf16.msra.mxu0 %v1165
    %1185 = vmatprep.subr.bf16.mxu0 0
    %1186 = vmatpush1.bf16.msra.mxu0 %v1164
    %1187 = vmatprep.subr.bf16.mxu0 0
    %1188 = vmatpush2.bf16.msra.mxu0 0
    %1189 = vmatprep.subr.bf16.mxu0 0
    %1190 = vmatpush2.bf16.msra.mxu0 0
    %1191 = vmatprep.subr.bf16.mxu0 0
    %1192 = vmatpush2.bf16.msra.mxu0 0
    %1193 = vmatprep.subr.bf16.mxu0 0
    %1194 = vmatpush2.bf16.msra.mxu0 0
    %1195 = vmatprep.subr.bf16.mxu0 0
    %1196 = vmatpush2.bf16.msra.mxu0 0
    %1197 = vmatprep.subr.bf16.mxu0 0
    %1198 = vmatpush2.bf16.msra.mxu0 0
    %1199 = vmatprep.subr.bf16.mxu0 0
    %1200 = vmatpush2.bf16.msra.mxu0 0
    %1201 = vmatprep.subr.bf16.mxu0 0
    %1202 = vmatpush2.bf16.msra.mxu0 0
    %1203 = vmatprep.mubr.bf16.mxu0 0
    %1204 = vmatmul.mubr.bf16.gmra.mxu0 %v1169
    %v1205 = vpop.f32.mrf.mxu0
    %v1206 = vadd.f32 %v1151, %v1205
    %v1207 = vpop.f32.mrf.mxu0
    %v1208 = vpop.f32.mrf.mxu0
    %v1209 = vpop.f32.mrf.mxu0
    %1210 = vdwg.mxu0
    %v1211 = vld [vmem:[%s3 + $0x2] sm:$0x1]
    %v1212 = vlaneseq
    %v1213 = vshrl.u32 %v1212, 7
    %v1214 = vsub.s32 0, %v1213
    %v1215 = vrot.slane %v1211, %v1214
    %v1216 = vadd.f32 %v1206, %v1215
    %v1217 = vpack.c.bf16 %v1216, %v1216
    %v1218 = vld [vmem:[#allocation7 + $0x50] sm:$0xf]
    %v1219 = vld [vmem:[#allocation7 + $0x54] sm:$0xf]
    %v1220 = vld [vmem:[#allocation7 + $0x58] sm:$0xf]
    %v1221 = vld [vmem:[#allocation7 + $0x5c] sm:$0xf]
    %v1222 = vld [vmem:[%s3 + $0x3] sm:$0x1]
    %v1223 = vlaneseq
    %v1224 = vshrl.u32 %v1223, 7
    %v1225 = vsub.s32 0, %v1224
    %v1226 = vrot.slane %v1222, %v1225
    %v1231 = vunpack.c.l.b16 %v1218
    %v1232 = vunpack.c.l.b16 %v1219
    %v1233 = vunpack.c.l.b16 %v1220
    %v1234 = vunpack.c.l.b16 %v1221
    %v1235 = vpack.c.b16 %v1232, %v1231
    %v1236 = vpack.c.b16 %v1234, %v1233
    %v1240 = vsel %vm92, %v1217, 0
    %1242 = vmatprep.subr.bf16.mxu0 0
    %1243 = vmatpush1.bf16.msra.mxu0 0
    %1244 = vmatprep.subr.bf16.mxu0 0
    %1245 = vmatpush1.bf16.msra.mxu0 0
    %1246 = vmatprep.subr.bf16.mxu0 0
    %1247 = vmatpush1.bf16.msra.mxu0 0
    %1248 = vmatprep.subr.bf16.mxu0 0
    %1249 = vmatpush1.bf16.msra.mxu0 0
    %1250 = vmatprep.subr.bf16.mxu0 0
    %1251 = vmatpush1.bf16.msra.mxu0 0
    %1252 = vmatprep.subr.bf16.mxu0 0
    %1253 = vmatpush1.bf16.msra.mxu0 0
    %1254 = vmatprep.subr.bf16.mxu0 0
    %1255 = vmatpush1.bf16.msra.mxu0 %v1236
    %1256 = vmatprep.subr.bf16.mxu0 0
    %1257 = vmatpush1.bf16.msra.mxu0 %v1235
    %1258 = vmatprep.subr.bf16.mxu0 0
    %1259 = vmatpush2.bf16.msra.mxu0 0
    %1260 = vmatprep.subr.bf16.mxu0 0
    %1261 = vmatpush2.bf16.msra.mxu0 0
    %1262 = vmatprep.subr.bf16.mxu0 0
    %1263 = vmatpush2.bf16.msra.mxu0 0
    %1264 = vmatprep.subr.bf16.mxu0 0
    %1265 = vmatpush2.bf16.msra.mxu0 0
    %1266 = vmatprep.subr.bf16.mxu0 0
    %1267 = vmatpush2.bf16.msra.mxu0 0
    %1268 = vmatprep.subr.bf16.mxu0 0
    %1269 = vmatpush2.bf16.msra.mxu0 0
    %1270 = vmatprep.subr.bf16.mxu0 0
    %1271 = vmatpush2.bf16.msra.mxu0 0
    %1272 = vmatprep.subr.bf16.mxu0 0
    %1273 = vmatpush2.bf16.msra.mxu0 0
    %1274 = vmatprep.mubr.bf16.mxu0 0
    %1275 = vmatmul.mubr.bf16.gmra.mxu0 %v1240
    %v1276 = vpop.f32.mrf.mxu0
    %v1277 = vadd.f32 %v1226, %v1276
    %v1278 = vpop.f32.mrf.mxu0
    %v1279 = vpop.f32.mrf.mxu0
    %v1280 = vpop.f32.mrf.mxu0
    %1281 = vdwg.mxu0
    %vm1282 = vcmask 82944
    %1283 = vst.msk [vmem:[#allocation8] sm:$0x3] %vm1282, %v1277
    // Predicated region
    $region30: #{tpu_custom_call.1} parent=1 // pred_check
      _
    $region31: #{tpu_custom_call.1} parent=1 // pred_check_branch
      %1285 = sbr.rel (0) target = $region33
    $region32: #{tpu_custom_call.1} parent=1 // pred_region
      %s1287 = ssub.s32 32, 32
      %1288 = vsyncadd [#allocation4], %s1287
      %s1290 = sshll.u32 [#allocation8], 4
      %s1291 = int_to_ptr.vmem [resolvable:$true] %s1290
      %1293 = dma.vmem_to_hbm [thread:$0]  %s1291, 32, %s4, [#allocation4]
    $region33: #{tpu_custom_call.1} parent=1 // pred_fallthru
      _
    // Predicated region
    $region34: #{tpu_custom_call.1} parent=1 // pred_check
      _
    $region35: #{tpu_custom_call.1} parent=1 // pred_check_branch
      %1295 = sbr.rel (0) target = $region37
    $region36: #{tpu_custom_call.1} parent=1 // pred_region
      %1296 = dma.done [#allocation4], 32
    $region37: #{tpu_custom_call.1} parent=1 // pred_fallthru
      _
    %1297 = vsyncpa [#allocation3], 1
    %1298 = vsyncpa [#allocation6], 1
    %1299 = vsyncpa [#allocation4], 1

</llo_original>
